<compile_context>
chip_gen: v6e
topology: v6e:2x2x1
jax: 0.10.0
libtpu: 0.0.40
codegen_flags: <defaults>
</compile_context>

<pallas_src>
import functools

import jax
import jax.numpy as jnp
from jax.experimental import pallas as pl
from jax.experimental.pallas import tpu as pltpu

_LANE = 128


def _leaky_relu(x, slope=0.2):
    return jnp.where(x >= 0, x, slope * x)


def _gat_layer(h, mask, eye, w_aug, c_aug, f_out):
    """Dense single-head GATConv with attention vectors / biases folded into W.

    w_aug = [W, W@a_dst^T, W@a_src^T, 0-pad]                (F_in, P)  bf16
    c_aug = [pre-agg bias + output bias, bias@a terms, pad] (1, P)     f32
    """
    y = jnp.dot(h, w_aug, preferred_element_type=jnp.float32) + c_aug   # (N, P)
    wh = y[:, :f_out]                                   # (N, F_out): Wh_j (+bias)
    e_dst = y[:, f_out:f_out + 1]                       # (N, 1)
    e_src_col = y[:, f_out + 1:f_out + 2]               # (N, 1)
    # Column -> row without relying on Mosaic 2-D transpose support: put the
    # column on the diagonal (free lane broadcast + select), reduce sublanes.
    e_src = jnp.sum(jnp.where(eye, e_src_col, 0.0), axis=0, keepdims=True)  # (1,N)
    scores = _leaky_relu(e_dst + e_src)                 # (N, N) outer sum
    scores = jnp.where(mask, scores, -1e30)             # plain float literal
    m = jnp.max(scores, axis=1, keepdims=True)
    p = jnp.exp(scores - m)                             # exact 0 off-edge (underflow)
    denom = jnp.sum(p, axis=1, keepdims=True)
    alpha = p / denom
    # TODO(synk): swap to pl.reciprocal(denom, approx=True) (free EUP slot) once
    # approx reciprocal is guaranteed on the deployment toolchain; the exact
    # divide keeps interpret-mode parity and is invisible at this size.
    return jnp.dot(alpha.astype(jnp.bfloat16), wh.astype(jnp.bfloat16),
                   preferred_element_type=jnp.float32)


def _gat_classifier_kernel(x_ref, adj_ref, w1_ref, c1_ref, w2_ref, c2_ref,
                           wm_ref, bm_ref, out_ref, *, f1, f2):
    n = adj_ref.shape[-1]
    # Hoisted once, reused by both layers (JAX does not CSE broadcasted iotas).
    eye = (jax.lax.broadcasted_iota(jnp.int32, (n, n), 0)
           == jax.lax.broadcasted_iota(jnp.int32, (n, n), 1))
    mask = adj_ref[...] > 0                              # bf16 0/1 adjacency

    # x = relu(gatConv1(x, edge_index))
    h = _gat_layer(x_ref[...], mask, eye, w1_ref[...], c1_ref[...], f1)
    h = jnp.maximum(h, 0.0)
    # x = relu(gatConv2(linear(x), edge_index))  (Linear + biases folded into W2/c2)
    h = _gat_layer(h.astype(jnp.bfloat16), mask, eye, w2_ref[...], c2_ref[...], f2)
    h = jnp.maximum(h, 0.0)
    # x = mlp(x); log_softmax(x, dim=1) -- lane-dense padded head (pad bias -1e30)
    logits = (jnp.dot(h.astype(jnp.bfloat16), wm_ref[...],
                      preferred_element_type=jnp.float32) + bm_ref[...])
    z = logits - jnp.max(logits, axis=1, keepdims=True)
    out_ref[...] = z - jnp.log(jnp.sum(jnp.exp(z), axis=1, keepdims=True))


def _pad_lanes(a, width, fill=0.0):
    out = jnp.full((a.shape[0], width), fill, jnp.float32)
    return out.at[:, :a.shape[1]].set(a.astype(jnp.float32))


def _prepare_params(params):
    """One-time host-side algebraic folds (full f32 precision), then bf16 cast."""
    hi = jax.lax.Precision.HIGHEST
    f1 = params["w1"].shape[1]
    f2 = params["w2"].shape[1]
    c = params["wm"].shape[1]

    def aug(w, a_dst, a_src):
        return jnp.concatenate(
            [w,
             jnp.dot(w, a_dst.T, precision=hi),
             jnp.dot(w, a_src.T, precision=hi)], axis=1)

    p1 = pl.cdiv(f1 + 2, _LANE) * _LANE      # 256
    p2 = pl.cdiv(f2 + 2, _LANE) * _LANE      # 128
    c_pad = pl.cdiv(c, _LANE) * _LANE        # 128

    # Layer 1: attention vectors folded into W1; output bias b1 folded
    # pre-aggregation (valid: alpha rows sum to 1 given self-loops) into the wh
    # columns only -- the attention columns of c1 stay 0.
    w1_aug = _pad_lanes(aug(params["w1"], params["a1_dst"], params["a1_src"]), p1)
    c1_aug = _pad_lanes(params["b1"], p1)

    # Layer 2: Linear folded in (W2' = Wl@W2; pre-agg bias bl@W2 also feeds the
    # attention columns), plus b2 folded pre-aggregation into the wh columns.
    a2_all = aug(params["w2"], params["a2_dst"], params["a2_src"])        # (128, 66)
    w2_aug = _pad_lanes(jnp.dot(params["wl"], a2_all, precision=hi), p2)
    c2_row = jnp.dot(params["bl"], a2_all, precision=hi)                  # (1, 66)
    c2_row = c2_row.at[:, :f2].add(params["b2"])
    c2_aug = _pad_lanes(c2_row, p2)

    # Classifier head padded to a full 128-lane tile (pad bias -1e30 so padded
    # logits never win the log_softmax); wrapper slices back to C.
    wm_pad = _pad_lanes(params["wm"], c_pad)
    bm_pad = _pad_lanes(params["bm"], c_pad, fill=-1e30)

    return dict(w1=w1_aug.astype(jnp.bfloat16), c1=c1_aug,
                w2=w2_aug.astype(jnp.bfloat16), c2=c2_aug,
                wm=wm_pad.astype(jnp.bfloat16), bm=bm_pad,
                f1=f1, f2=f2, c=c, c_pad=c_pad)


def make_gat_classifier(params):
    """Fold/cast params ONCE; return a jitted batched forward.

    forward(x, adj): x (B, N, F_in) f32, adj (B, N, N) 0/1 (with self-loops)
                     -> (B, N, num_classes) f32 log-probabilities.
    """
    fd = _prepare_params(params)
    f1, f2, c, c_pad = fd["f1"], fd["f2"], fd["c"], fd["c_pad"]
    kernel = functools.partial(_gat_classifier_kernel, f1=f1, f2=f2)
    weights = (fd["w1"], fd["c1"], fd["w2"], fd["c2"], fd["wm"], fd["bm"])

    @jax.jit
    def forward(x, adj):
        b, n, f_in = x.shape
        args = (x.astype(jnp.bfloat16), adj.astype(jnp.bfloat16)) + weights

        in_specs = (
            [pl.BlockSpec((None, n, f_in), lambda g: (g, 0, 0)),
             pl.BlockSpec((None, n, n), lambda g: (g, 0, 0))]
            + [pl.BlockSpec(w.shape, lambda g: (0, 0)) for w in weights])
        out_specs = pl.BlockSpec((None, n, c_pad), lambda g: (g, 0, 0))

        p1, p2 = fd["w1"].shape[1], fd["w2"].shape[1]
        flops = 2 * b * n * (f_in * p1 + n * f1 + f1 * p2 + n * f2 + f2 * c_pad)
        transcendentals = b * (2 * n * n + n * c_pad + n)
        bytes_accessed = (sum(int(a.size) * a.dtype.itemsize for a in args)
                          + b * n * c_pad * 4)

        # TODO(synk): for large N, row-tile the query axis with a flash-style
        # online softmax over adj column blocks (stream adj in bf16, set
        # vmem_limit_bytes); at N<=a few hundred one resident block is optimal.
        # TODO(synk): optionally pack 2-4 graphs block-diagonally so the (N,N)
        # score math is 128/256 lanes dense; the -1e30 mask already zeroes
        # cross-graph attention.
        out_pad = pl.pallas_call(
            kernel,
            out_shape=jax.ShapeDtypeStruct((b, n, c_pad), jnp.float32),
            grid_spec=pltpu.PrefetchScalarGridSpec(
                num_scalar_prefetch=0,
                grid=(b,),
                in_specs=in_specs,
                out_specs=out_specs,
            ),
            compiler_params=pltpu.CompilerParams(
                dimension_semantics=("parallel",)),   # v7x: batch across 2 TCs
            cost_estimate=pl.CostEstimate(
                flops=flops, transcendentals=transcendentals,
                bytes_accessed=bytes_accessed),
        )(*args)
        return out_pad[..., :c]

    return forward


def _reference_forward(x, adj, p):
    """Unfused original semantics, full f32 precision (ground truth)."""
    hi = jax.lax.Precision.HIGHEST

    def gat(h, w, a_s, a_d, b):
        wh = jnp.dot(h, w, precision=hi)
        e = jax.nn.leaky_relu(jnp.dot(wh, a_d.T, precision=hi)
                              + jnp.dot(wh, a_s.T, precision=hi).T, 0.2)
        e = jnp.where(adj > 0, e, -1e30)
        al = jnp.exp(e - jnp.max(e, axis=1, keepdims=True)) * adj
        al = al / al.sum(axis=1, keepdims=True)
        return jnp.dot(al, wh, precision=hi) + b

    h = jax.nn.relu(gat(x, p["w1"], p["a1_src"], p["a1_dst"], p["b1"]))
    h = jnp.dot(h, p["wl"], precision=hi) + p["bl"]
    h = jax.nn.relu(gat(h, p["w2"], p["a2_src"], p["a2_dst"], p["b2"]))
    logits = jnp.dot(h, p["wm"], precision=hi) + p["bm"]
    return jax.nn.log_softmax(logits, axis=1)


if __name__ == "__main__":
    B, N, F_IN, NUM_CLASSES, NUM_EDGES = 2, 64, 16, 8, 256

    key = jax.random.PRNGKey(0)
    k = jax.random.split(key, 14)

    def glorot(kk, shape):
        lim = (6.0 / (shape[0] + shape[1])) ** 0.5
        return jax.random.uniform(kk, shape, jnp.float32, -lim, lim)

    params = {
        "w1":     glorot(k[0], (F_IN, 128)),
        "a1_src": glorot(k[1], (1, 128)),
        "a1_dst": glorot(k[2], (1, 128)),
        "b1":     0.01 * jax.random.normal(k[3], (1, 128), jnp.float32),
        "wl":     glorot(k[4], (128, 128)),
        "bl":     0.01 * jax.random.normal(k[5], (1, 128), jnp.float32),
        "w2":     glorot(k[6], (128, 64)),
        "a2_src": glorot(k[7], (1, 64)),
        "a2_dst": glorot(k[8], (1, 64)),
        "b2":     0.01 * jax.random.normal(k[9], (1, 64), jnp.float32),
        "wm":     glorot(k[10], (64, NUM_CLASSES)),
        "bm":     0.01 * jax.random.normal(k[11], (1, NUM_CLASSES), jnp.float32),
    }

    x = jax.random.normal(k[12], (B, N, F_IN), jnp.float32)

    # Deterministic random edge_index per graph; dense mask adj[g, dst, src] = 1,
    # plus self-loops (PyG GATConv default).
    def make_adj(kk):
        src = jax.random.randint(kk, (NUM_EDGES,), 0, N)
        dst = jax.random.randint(jax.random.fold_in(kk, 1), (NUM_EDGES,), 0, N)
        a = jnp.zeros((N, N), jnp.float32).at[dst, src].set(1.0)
        return jnp.maximum(a, jnp.eye(N, dtype=jnp.float32))

    adj = jnp.stack([make_adj(jax.random.fold_in(k[13], g)) for g in range(B)])

    forward = make_gat_classifier(params)   # one-time param folding + jit
    out = jax.block_until_ready(forward(x, adj))

    ref = jnp.stack([_reference_forward(x[g], adj[g], params) for g in range(B)])
    ref = jax.block_until_ready(ref)

    assert out.shape == (B, N, NUM_CLASSES)
    assert bool(jnp.all(jnp.isfinite(out)))
    # Tolerance sized for single-pass bf16 MXU operands / bf16-shipped weights in
    # the kernel vs. the f32 'highest'-precision reference.
    assert float(jnp.max(jnp.abs(out - ref))) < 5e-2

    print("KERNEL_OK")
</pallas_src>

<mosaic_0001>
module attributes {stable_mosaic.version = 11 : i64} {
  func.func @_gat_classifier_kernel(%arg0: i32, %arg1: memref<1x64x16xbf16, #tpu.memory_space<vmem>>, %arg2: memref<1x64x64xbf16, #tpu.memory_space<vmem>>, %arg3: memref<16x256xbf16, #tpu.memory_space<vmem>>, %arg4: memref<1x256xf32, #tpu.memory_space<vmem>>, %arg5: memref<128x128xbf16, #tpu.memory_space<vmem>>, %arg6: memref<1x128xf32, #tpu.memory_space<vmem>>, %arg7: memref<64x128xbf16, #tpu.memory_space<vmem>>, %arg8: memref<1x128xf32, #tpu.memory_space<vmem>>, %arg9: memref<1x64x128xf32, #tpu.memory_space<vmem>>) attributes {dimension_semantics = [#tpu.dimension_semantics<parallel>], iteration_bounds = array<i64: 2>, scalar_prefetch = 0 : i64, scratch_operands = 0 : i64, tpu.core_type = #tpu.core_type<tc>, window_params = [{transform_indices = @transform_0, window_bounds = array<i64: 1, 64, 16>}, {transform_indices = @transform_1, window_bounds = array<i64: 1, 64, 64>}, {pipeline_mode = #tpu.pipeline_mode<synchronous>, transform_indices = @transform_2, window_bounds = array<i64: 16, 256>}, {pipeline_mode = #tpu.pipeline_mode<synchronous>, transform_indices = @transform_3, window_bounds = array<i64: 1, 256>}, {pipeline_mode = #tpu.pipeline_mode<synchronous>, transform_indices = @transform_4, window_bounds = array<i64: 128, 128>}, {pipeline_mode = #tpu.pipeline_mode<synchronous>, transform_indices = @transform_5, window_bounds = array<i64: 1, 128>}, {pipeline_mode = #tpu.pipeline_mode<synchronous>, transform_indices = @transform_6, window_bounds = array<i64: 64, 128>}, {pipeline_mode = #tpu.pipeline_mode<synchronous>, transform_indices = @transform_7, window_bounds = array<i64: 1, 128>}, {transform_indices = @transform_8, window_bounds = array<i64: 1, 64, 128>}]} {
    %0 = tpu.iota {dimensions = array<i32: 0>} : vector<64x64xi32>
    %1 = tpu.iota {dimensions = array<i32: 1>} : vector<64x64xi32>
    %2 = arith.cmpi eq, %0, %1 : vector<64x64xi32>
    %c0 = arith.constant 0 : index
    %c0_0 = arith.constant 0 : index
    %c0_1 = arith.constant 0 : index
    %3 = vector.load %arg2[%c0, %c0_0, %c0_1] : memref<1x64x64xbf16, #tpu.memory_space<vmem>>, vector<1x64x64xbf16>
    %4 = vector.shape_cast %3 : vector<1x64x64xbf16> to vector<64x64xbf16>
    %cst = arith.constant 0.000000e+00 : bf16
    %5 = vector.broadcast %cst : bf16 to vector<64x64xbf16>
    %6 = arith.cmpf ogt, %4, %5 : vector<64x64xbf16>
    %c0_2 = arith.constant 0 : index
    %c0_3 = arith.constant 0 : index
    %c0_4 = arith.constant 0 : index
    %7 = vector.load %arg1[%c0_2, %c0_3, %c0_4] : memref<1x64x16xbf16, #tpu.memory_space<vmem>>, vector<1x64x16xbf16>
    %8 = vector.shape_cast %7 : vector<1x64x16xbf16> to vector<64x16xbf16>
    %c0_5 = arith.constant 0 : index
    %c0_6 = arith.constant 0 : index
    %9 = vector.load %arg3[%c0_5, %c0_6] : memref<16x256xbf16, #tpu.memory_space<vmem>>, vector<16x256xbf16>
    %c0_7 = arith.constant 0 : index
    %c0_8 = arith.constant 0 : index
    %10 = vector.load %arg4[%c0_7, %c0_8] : memref<1x256xf32, #tpu.memory_space<vmem>>, vector<1x256xf32>
    %cst_9 = arith.constant dense<0.000000e+00> : vector<64x256xf32>
    %11 = tpu.matmul %8, %9, %cst_9 {dimension_numbers = #tpu.dot_dimension_numbers<[1], [0], [0], [1], [0, 0, 1, 1], [], []>} : vector<64x16xbf16>, vector<16x256xbf16>, vector<64x256xf32> -> vector<64x256xf32>
    %12 = vector.broadcast %10 : vector<1x256xf32> to vector<64x256xf32>
    %13 = arith.addf %11, %12 : vector<64x256xf32>
    %14 = vector.extract_strided_slice %13 {offsets = [0, 0], sizes = [64, 128], strides = [1, 1]} : vector<64x256xf32> to vector<64x128xf32>
    %15 = vector.extract_strided_slice %13 {offsets = [0, 128], sizes = [64, 1], strides = [1, 1]} : vector<64x256xf32> to vector<64x1xf32>
    %16 = vector.extract_strided_slice %13 {offsets = [0, 129], sizes = [64, 1], strides = [1, 1]} : vector<64x256xf32> to vector<64x1xf32>
    %cst_10 = arith.constant 0.000000e+00 : f32
    %17 = vector.shape_cast %16 : vector<64x1xf32> to vector<64x1xf32>
    %18 = vector.broadcast %17 : vector<64x1xf32> to vector<64x64xf32>
    %19 = vector.broadcast %cst_10 : f32 to vector<64x64xf32>
    %20 = arith.select %2, %18, %19 : vector<64x64xi1>, vector<64x64xf32>
    %cst_11 = arith.constant dense<0.000000e+00> : vector<64xf32>
    %21 = vector.multi_reduction <add>, %20, %cst_11 [0] : vector<64x64xf32> to vector<64xf32>
    %22 = vector.shape_cast %21 : vector<64xf32> to vector<1x64xf32>
    %23 = vector.broadcast %15 : vector<64x1xf32> to vector<64x64xf32>
    %24 = vector.broadcast %22 : vector<1x64xf32> to vector<64x64xf32>
    %25 = arith.addf %23, %24 : vector<64x64xf32>
    %cst_12 = arith.constant 0.000000e+00 : f32
    %26 = vector.broadcast %cst_12 : f32 to vector<64x64xf32>
    %27 = arith.cmpf oge, %25, %26 : vector<64x64xf32>
    %cst_13 = arith.constant 2.000000e-01 : f32
    %28 = vector.broadcast %cst_13 : f32 to vector<64x64xf32>
    %29 = arith.mulf %28, %25 : vector<64x64xf32>
    %30 = arith.select %27, %25, %29 : vector<64x64xi1>, vector<64x64xf32>
    %cst_14 = arith.constant -1.000000e+30 : f32
    %31 = vector.broadcast %cst_14 : f32 to vector<64x64xf32>
    %32 = arith.select %6, %30, %31 : vector<64x64xi1>, vector<64x64xf32>
    %cst_15 = arith.constant dense<0xFF800000> : vector<64xf32>
    %33 = vector.multi_reduction <maximumf>, %32, %cst_15 [1] : vector<64x64xf32> to vector<64xf32>
    %34 = vector.shape_cast %33 : vector<64xf32> to vector<64x1xf32>
    %35 = vector.broadcast %34 : vector<64x1xf32> to vector<64x64xf32>
    %36 = arith.subf %32, %35 : vector<64x64xf32>
    %37 = math.exp %36 : vector<64x64xf32>
    %cst_16 = arith.constant dense<0.000000e+00> : vector<64xf32>
    %38 = vector.multi_reduction <add>, %37, %cst_16 [1] : vector<64x64xf32> to vector<64xf32>
    %39 = vector.shape_cast %38 : vector<64xf32> to vector<64x1xf32>
    %40 = vector.broadcast %39 : vector<64x1xf32> to vector<64x64xf32>
    %41 = arith.divf %37, %40 : vector<64x64xf32>
    %42 = arith.truncf %41 : vector<64x64xf32> to vector<64x64xbf16>
    %43 = arith.truncf %14 : vector<64x128xf32> to vector<64x128xbf16>
    %cst_17 = arith.constant dense<0.000000e+00> : vector<64x128xf32>
    %44 = tpu.matmul %42, %43, %cst_17 {dimension_numbers = #tpu.dot_dimension_numbers<[1], [0], [0], [1], [0, 0, 1, 1], [], []>} : vector<64x64xbf16>, vector<64x128xbf16>, vector<64x128xf32> -> vector<64x128xf32>
    %cst_18 = arith.constant 0.000000e+00 : f32
    %45 = vector.broadcast %cst_18 : f32 to vector<64x128xf32>
    %46 = arith.maximumf %44, %45 : vector<64x128xf32>
    %47 = arith.truncf %46 : vector<64x128xf32> to vector<64x128xbf16>
    %c0_19 = arith.constant 0 : index
    %c0_20 = arith.constant 0 : index
    %48 = vector.load %arg5[%c0_19, %c0_20] : memref<128x128xbf16, #tpu.memory_space<vmem>>, vector<128x128xbf16>
    %c0_21 = arith.constant 0 : index
    %c0_22 = arith.constant 0 : index
    %49 = vector.load %arg6[%c0_21, %c0_22] : memref<1x128xf32, #tpu.memory_space<vmem>>, vector<1x128xf32>
    %cst_23 = arith.constant dense<0.000000e+00> : vector<64x128xf32>
    %50 = tpu.matmul %47, %48, %cst_23 {dimension_numbers = #tpu.dot_dimension_numbers<[1], [0], [0], [1], [0, 0, 1, 1], [], []>} : vector<64x128xbf16>, vector<128x128xbf16>, vector<64x128xf32> -> vector<64x128xf32>
    %51 = vector.broadcast %49 : vector<1x128xf32> to vector<64x128xf32>
    %52 = arith.addf %50, %51 : vector<64x128xf32>
    %53 = vector.extract_strided_slice %52 {offsets = [0, 0], sizes = [64, 64], strides = [1, 1]} : vector<64x128xf32> to vector<64x64xf32>
    %54 = vector.extract_strided_slice %52 {offsets = [0, 64], sizes = [64, 1], strides = [1, 1]} : vector<64x128xf32> to vector<64x1xf32>
    %55 = vector.extract_strided_slice %52 {offsets = [0, 65], sizes = [64, 1], strides = [1, 1]} : vector<64x128xf32> to vector<64x1xf32>
    %cst_24 = arith.constant 0.000000e+00 : f32
    %56 = vector.shape_cast %55 : vector<64x1xf32> to vector<64x1xf32>
    %57 = vector.broadcast %56 : vector<64x1xf32> to vector<64x64xf32>
    %58 = vector.broadcast %cst_24 : f32 to vector<64x64xf32>
    %59 = arith.select %2, %57, %58 : vector<64x64xi1>, vector<64x64xf32>
    %cst_25 = arith.constant dense<0.000000e+00> : vector<64xf32>
    %60 = vector.multi_reduction <add>, %59, %cst_25 [0] : vector<64x64xf32> to vector<64xf32>
    %61 = vector.shape_cast %60 : vector<64xf32> to vector<1x64xf32>
    %62 = vector.broadcast %54 : vector<64x1xf32> to vector<64x64xf32>
    %63 = vector.broadcast %61 : vector<1x64xf32> to vector<64x64xf32>
    %64 = arith.addf %62, %63 : vector<64x64xf32>
    %cst_26 = arith.constant 0.000000e+00 : f32
    %65 = vector.broadcast %cst_26 : f32 to vector<64x64xf32>
    %66 = arith.cmpf oge, %64, %65 : vector<64x64xf32>
    %cst_27 = arith.constant 2.000000e-01 : f32
    %67 = vector.broadcast %cst_27 : f32 to vector<64x64xf32>
    %68 = arith.mulf %67, %64 : vector<64x64xf32>
    %69 = arith.select %66, %64, %68 : vector<64x64xi1>, vector<64x64xf32>
    %cst_28 = arith.constant -1.000000e+30 : f32
    %70 = vector.broadcast %cst_28 : f32 to vector<64x64xf32>
    %71 = arith.select %6, %69, %70 : vector<64x64xi1>, vector<64x64xf32>
    %cst_29 = arith.constant dense<0xFF800000> : vector<64xf32>
    %72 = vector.multi_reduction <maximumf>, %71, %cst_29 [1] : vector<64x64xf32> to vector<64xf32>
    %73 = vector.shape_cast %72 : vector<64xf32> to vector<64x1xf32>
    %74 = vector.broadcast %73 : vector<64x1xf32> to vector<64x64xf32>
    %75 = arith.subf %71, %74 : vector<64x64xf32>
    %76 = math.exp %75 : vector<64x64xf32>
    %cst_30 = arith.constant dense<0.000000e+00> : vector<64xf32>
    %77 = vector.multi_reduction <add>, %76, %cst_30 [1] : vector<64x64xf32> to vector<64xf32>
    %78 = vector.shape_cast %77 : vector<64xf32> to vector<64x1xf32>
    %79 = vector.broadcast %78 : vector<64x1xf32> to vector<64x64xf32>
    %80 = arith.divf %76, %79 : vector<64x64xf32>
    %81 = arith.truncf %80 : vector<64x64xf32> to vector<64x64xbf16>
    %82 = arith.truncf %53 : vector<64x64xf32> to vector<64x64xbf16>
    %cst_31 = arith.constant dense<0.000000e+00> : vector<64x64xf32>
    %83 = tpu.matmul %81, %82, %cst_31 {dimension_numbers = #tpu.dot_dimension_numbers<[1], [0], [0], [1], [0, 0, 1, 1], [], []>} : vector<64x64xbf16>, vector<64x64xbf16>, vector<64x64xf32> -> vector<64x64xf32>
    %cst_32 = arith.constant 0.000000e+00 : f32
    %84 = vector.broadcast %cst_32 : f32 to vector<64x64xf32>
    %85 = arith.maximumf %83, %84 : vector<64x64xf32>
    %86 = arith.truncf %85 : vector<64x64xf32> to vector<64x64xbf16>
    %c0_33 = arith.constant 0 : index
    %c0_34 = arith.constant 0 : index
    %87 = vector.load %arg7[%c0_33, %c0_34] : memref<64x128xbf16, #tpu.memory_space<vmem>>, vector<64x128xbf16>
    %cst_35 = arith.constant dense<0.000000e+00> : vector<64x128xf32>
    %88 = tpu.matmul %86, %87, %cst_35 {dimension_numbers = #tpu.dot_dimension_numbers<[1], [0], [0], [1], [0, 0, 1, 1], [], []>} : vector<64x64xbf16>, vector<64x128xbf16>, vector<64x128xf32> -> vector<64x128xf32>
    %c0_36 = arith.constant 0 : index
    %c0_37 = arith.constant 0 : index
    %89 = vector.load %arg8[%c0_36, %c0_37] : memref<1x128xf32, #tpu.memory_space<vmem>>, vector<1x128xf32>
    %90 = vector.broadcast %89 : vector<1x128xf32> to vector<64x128xf32>
    %91 = arith.addf %88, %90 : vector<64x128xf32>
    %cst_38 = arith.constant dense<0xFF800000> : vector<64xf32>
    %92 = vector.multi_reduction <maximumf>, %91, %cst_38 [1] : vector<64x128xf32> to vector<64xf32>
    %93 = vector.shape_cast %92 : vector<64xf32> to vector<64x1xf32>
    %94 = vector.broadcast %93 : vector<64x1xf32> to vector<64x128xf32>
    %95 = arith.subf %91, %94 : vector<64x128xf32>
    %96 = math.exp %95 : vector<64x128xf32>
    %cst_39 = arith.constant dense<0.000000e+00> : vector<64xf32>
    %97 = vector.multi_reduction <add>, %96, %cst_39 [1] : vector<64x128xf32> to vector<64xf32>
    %98 = vector.shape_cast %97 : vector<64xf32> to vector<64x1xf32>
    %99 = math.log %98 : vector<64x1xf32>
    %100 = vector.broadcast %99 : vector<64x1xf32> to vector<64x128xf32>
    %101 = arith.subf %95, %100 : vector<64x128xf32>
    %c0_40 = arith.constant 0 : index
    %c0_41 = arith.constant 0 : index
    %c0_42 = arith.constant 0 : index
    %102 = vector.load %arg9[%c0_40, %c0_41, %c0_42] : memref<1x64x128xf32, #tpu.memory_space<vmem>>, vector<1x64x128xf32>
    %103 = vector.shape_cast %102 : vector<1x64x128xf32> to vector<64x128xf32>
    %104 = vector.shape_cast %101 : vector<64x128xf32> to vector<1x64x128xf32>
    tpu.vector_store %arg9[%c0_40, %c0_41, %c0_42], %104 {strides = array<i32>} : memref<1x64x128xf32, #tpu.memory_space<vmem>>, vector<1x64x128xf32>,
    return
  }
  func.func @transform_0(%arg0: i32) -> (i32, i32, i32) {
    %c0_i32 = arith.constant 0 : i32
    %c0_i32_0 = arith.constant 0 : i32
    %c0_i32_1 = arith.constant 0 : i32
    return %arg0, %c0_i32, %c0_i32_0 : i32, i32, i32
  }
  func.func @transform_1(%arg0: i32) -> (i32, i32, i32) {
    %c0_i32 = arith.constant 0 : i32
    %c0_i32_0 = arith.constant 0 : i32
    %c0_i32_1 = arith.constant 0 : i32
    return %arg0, %c0_i32, %c0_i32_0 : i32, i32, i32
  }
  func.func @transform_2(%arg0: i32) -> (i32, i32) {
    %c0_i32 = arith.constant 0 : i32
    %c0_i32_0 = arith.constant 0 : i32
    %c0_i32_1 = arith.constant 0 : i32
    return %c0_i32, %c0_i32_0 : i32, i32
  }
  func.func @transform_3(%arg0: i32) -> (i32, i32) {
    %c0_i32 = arith.constant 0 : i32
    %c0_i32_0 = arith.constant 0 : i32
    %c0_i32_1 = arith.constant 0 : i32
    return %c0_i32, %c0_i32_0 : i32, i32
  }
  func.func @transform_4(%arg0: i32) -> (i32, i32) {
    %c0_i32 = arith.constant 0 : i32
    %c0_i32_0 = arith.constant 0 : i32
    %c0_i32_1 = arith.constant 0 : i32
    return %c0_i32, %c0_i32_0 : i32, i32
  }
  func.func @transform_5(%arg0: i32) -> (i32, i32) {
    %c0_i32 = arith.constant 0 : i32
    %c0_i32_0 = arith.constant 0 : i32
    %c0_i32_1 = arith.constant 0 : i32
    return %c0_i32, %c0_i32_0 : i32, i32
  }
  func.func @transform_6(%arg0: i32) -> (i32, i32) {
    %c0_i32 = arith.constant 0 : i32
    %c0_i32_0 = arith.constant 0 : i32
    %c0_i32_1 = arith.constant 0 : i32
    return %c0_i32, %c0_i32_0 : i32, i32
  }
  func.func @transform_7(%arg0: i32) -> (i32, i32) {
    %c0_i32 = arith.constant 0 : i32
    %c0_i32_0 = arith.constant 0 : i32
    %c0_i32_1 = arith.constant 0 : i32
    return %c0_i32, %c0_i32_0 : i32, i32
  }
  func.func @transform_8(%arg0: i32) -> (i32, i32, i32) {
    %c0_i32 = arith.constant 0 : i32
    %c0_i32_0 = arith.constant 0 : i32
    %c0_i32_1 = arith.constant 0 : i32
    return %arg0, %c0_i32, %c0_i32_0 : i32, i32, i32
  }
}

</mosaic_0001>

<llo_original>
// kernel: forward.1
$region0: #{forward.1}
  #allocation0 [shape = 'u32[]', space=smem, size = 0x4, offset = 0x4, fixed_abs, tag = 'smem constant byte address 0x4 - core index']
  #allocation1 [shape = 'u32[144,128]{1,0:T(1,128)}', space=vmem, size = 0x12000, scoped, tag = 'internal scratch']
  %s0 = inlined_call_operand.vmem [shape: bf16[2,64,16], index: 0, kind: input, shape index: {}]
  %s1 = inlined_call_operand.vmem [shape: bf16[2,64,64], index: 1, kind: input, shape index: {}]
  %s2 = inlined_call_operand.vmem [shape: bf16[16,256], index: 2, kind: input, shape index: {}]
  %s3 = inlined_call_operand.vmem [shape: f32[1,256], index: 3, kind: input, shape index: {}]
  %s4 = inlined_call_operand.vmem [shape: bf16[128,128], index: 4, kind: input, shape index: {}]
  %s5 = inlined_call_operand.vmem [shape: f32[1,128], index: 5, kind: input, shape index: {}]
  %s6 = inlined_call_operand.vmem [shape: bf16[64,128], index: 6, kind: input, shape index: {}]
  %s7 = inlined_call_operand.vmem [shape: f32[1,128], index: 7, kind: input, shape index: {}]
  %s8 = inlined_call_operand.vmem [shape: f32[2,64,128], index: 8, kind: output, shape index: {}]
  %s9 = sld [smem:[#allocation0]]
  $region65: #{forward.1} parent=0
    _
  %s11 = ssub.s32 1, %s9
  %s12 = scalar_select 0, %s11, %s9
  loop: start=0, step=1, limit=4
  $region2: #{forward.1} parent=0 // loop_pre_header
    _
  $region3: #{forward.1} parent=0 // loop_header
    %s14 = sphi 0, %s18
    %p15 = scmp.ge.s32.totalorder %s14, 4
    %s24 = sphi 0, %s26
    %s27 = sphi 0, %s24
    %s28 = sphi 0, %s27
    %s44 = sphi 0, %s28
    %s50 = sphi 0, %s52
    %s53 = sphi 0, %s50
    %s54 = sphi 0, %s53
    %s70 = sphi 0, %s54
    %s74 = sphi 0, %s74
    %s76 = sphi 0, %s74
    %s77 = sphi 0, %s76
    %s91 = sphi 0, %s77
    %s95 = sphi 0, %s95
    %s97 = sphi 0, %s95
    %s98 = sphi 0, %s97
    %s112 = sphi 0, %s98
    %s116 = sphi 0, %s116
    %s118 = sphi 0, %s116
    %s119 = sphi 0, %s118
    %s133 = sphi 0, %s119
    %s137 = sphi 0, %s137
    %s139 = sphi 0, %s137
    %s140 = sphi 0, %s139
    %s154 = sphi 0, %s140
    %s158 = sphi 0, %s158
    %s160 = sphi 0, %s158
    %s161 = sphi 0, %s160
    %s175 = sphi 0, %s161
    %s179 = sphi 0, %s179
    %s181 = sphi 0, %s179
    %s182 = sphi 0, %s181
    %s196 = sphi 0, %s182
    %s202 = sphi 0, %s204
    %s205 = sphi 0, %s202
    %s206 = sphi 0, %s205
    %s222 = sphi 0, %s206
  $region4: #{forward.1} parent=0 // loop_header_branch
    %17 = sbr.rel (%p15) target = $region8
  $region5: #{forward.1} parent=0 // loop_body
    %s19 = ssub.s32 %s14, 1
    %s20 = ssub.s32 %s14, 2
    %s21 = sadd.s32 %s14, 1
    %s22 = ssub.s32 %s14, %s21
    %p23 = scmp.eq.s32.totalorder %s22, 0
    %s25 = sadd.s32 %s24, 1
    %s26 = scalar_select %p23, %s24, %s25
    %p29 = pneg %p23
    %p30 = scmp.eq.s32.totalorder %s14, 1
    %p31 = por %p29, %p30
    %p32 = scmp.ne.s32.totalorder %s24, %s27
    %p33 = scmp.eq.s32.totalorder %s14, 0
    %p34 = por %p32, %p33
    %p35 = scmp.ne.s32.totalorder %s24, %s27
    %p36 = scmp.eq.s32.totalorder %s19, 1
    %p37 = por %p35, %p36
    %p38 = scmp.ne.s32.totalorder %s27, %s28
    %p39 = scmp.eq.s32.totalorder %s19, 0
    %p40 = por %p38, %p39
    %p41 = scmp.ne.s32.totalorder %s27, %s28
    %p42 = scmp.eq.s32.totalorder %s20, 1
    %p43 = por %p41, %p42
    %p45 = scmp.ne.s32.totalorder %s28, %s44
    %p46 = scmp.eq.s32.totalorder %s20, 0
    %p47 = por %p45, %p46
    %s48 = ssub.s32 %s14, %s21
    %p49 = scmp.eq.s32.totalorder %s48, 0
    %s51 = sadd.s32 %s50, 1
    %s52 = scalar_select %p49, %s50, %s51
    %p55 = pneg %p49
    %p56 = scmp.eq.s32.totalorder %s14, 1
    %p57 = por %p55, %p56
    %p58 = scmp.ne.s32.totalorder %s50, %s53
    %p59 = scmp.eq.s32.totalorder %s14, 0
    %p60 = por %p58, %p59
    %p61 = scmp.ne.s32.totalorder %s50, %s53
    %p62 = scmp.eq.s32.totalorder %s19, 1
    %p63 = por %p61, %p62
    %p64 = scmp.ne.s32.totalorder %s53, %s54
    %p65 = scmp.eq.s32.totalorder %s19, 0
    %p66 = por %p64, %p65
    %p67 = scmp.ne.s32.totalorder %s53, %s54
    %p68 = scmp.eq.s32.totalorder %s20, 1
    %p69 = por %p67, %p68
    %p71 = scmp.ne.s32.totalorder %s54, %s70
    %p72 = scmp.eq.s32.totalorder %s20, 0
    %p73 = por %p71, %p72
    %s75 = sadd.s32 %s74, 1
    %p78 = scmp.eq.s32.totalorder %s14, 1
    %p79 = scmp.ne.s32.totalorder %s74, %s76
    %p80 = scmp.eq.s32.totalorder %s14, 0
    %p81 = por %p79, %p80
    %p82 = scmp.ne.s32.totalorder %s74, %s76
    %p83 = scmp.eq.s32.totalorder %s19, 1
    %p84 = por %p82, %p83
    %p85 = scmp.ne.s32.totalorder %s76, %s77
    %p86 = scmp.eq.s32.totalorder %s19, 0
    %p87 = por %p85, %p86
    %p88 = scmp.ne.s32.totalorder %s76, %s77
    %p89 = scmp.eq.s32.totalorder %s20, 1
    %p90 = por %p88, %p89
    %p92 = scmp.ne.s32.totalorder %s77, %s91
    %p93 = scmp.eq.s32.totalorder %s20, 0
    %p94 = por %p92, %p93
    %s96 = sadd.s32 %s95, 1
    %p99 = scmp.eq.s32.totalorder %s14, 1
    %p100 = scmp.ne.s32.totalorder %s95, %s97
    %p101 = scmp.eq.s32.totalorder %s14, 0
    %p102 = por %p100, %p101
    %p103 = scmp.ne.s32.totalorder %s95, %s97
    %p104 = scmp.eq.s32.totalorder %s19, 1
    %p105 = por %p103, %p104
    %p106 = scmp.ne.s32.totalorder %s97, %s98
    %p107 = scmp.eq.s32.totalorder %s19, 0
    %p108 = por %p106, %p107
    %p109 = scmp.ne.s32.totalorder %s97, %s98
    %p110 = scmp.eq.s32.totalorder %s20, 1
    %p111 = por %p109, %p110
    %p113 = scmp.ne.s32.totalorder %s98, %s112
    %p114 = scmp.eq.s32.totalorder %s20, 0
    %p115 = por %p113, %p114
    %s117 = sadd.s32 %s116, 1
    %p120 = scmp.eq.s32.totalorder %s14, 1
    %p121 = scmp.ne.s32.totalorder %s116, %s118
    %p122 = scmp.eq.s32.totalorder %s14, 0
    %p123 = por %p121, %p122
    %p124 = scmp.ne.s32.totalorder %s116, %s118
    %p125 = scmp.eq.s32.totalorder %s19, 1
    %p126 = por %p124, %p125
    %p127 = scmp.ne.s32.totalorder %s118, %s119
    %p128 = scmp.eq.s32.totalorder %s19, 0
    %p129 = por %p127, %p128
    %p130 = scmp.ne.s32.totalorder %s118, %s119
    %p131 = scmp.eq.s32.totalorder %s20, 1
    %p132 = por %p130, %p131
    %p134 = scmp.ne.s32.totalorder %s119, %s133
    %p135 = scmp.eq.s32.totalorder %s20, 0
    %p136 = por %p134, %p135
    %s138 = sadd.s32 %s137, 1
    %p141 = scmp.eq.s32.totalorder %s14, 1
    %p142 = scmp.ne.s32.totalorder %s137, %s139
    %p143 = scmp.eq.s32.totalorder %s14, 0
    %p144 = por %p142, %p143
    %p145 = scmp.ne.s32.totalorder %s137, %s139
    %p146 = scmp.eq.s32.totalorder %s19, 1
    %p147 = por %p145, %p146
    %p148 = scmp.ne.s32.totalorder %s139, %s140
    %p149 = scmp.eq.s32.totalorder %s19, 0
    %p150 = por %p148, %p149
    %p151 = scmp.ne.s32.totalorder %s139, %s140
    %p152 = scmp.eq.s32.totalorder %s20, 1
    %p153 = por %p151, %p152
    %p155 = scmp.ne.s32.totalorder %s140, %s154
    %p156 = scmp.eq.s32.totalorder %s20, 0
    %p157 = por %p155, %p156
    %s159 = sadd.s32 %s158, 1
    %p162 = scmp.eq.s32.totalorder %s14, 1
    %p163 = scmp.ne.s32.totalorder %s158, %s160
    %p164 = scmp.eq.s32.totalorder %s14, 0
    %p165 = por %p163, %p164
    %p166 = scmp.ne.s32.totalorder %s158, %s160
    %p167 = scmp.eq.s32.totalorder %s19, 1
    %p168 = por %p166, %p167
    %p169 = scmp.ne.s32.totalorder %s160, %s161
    %p170 = scmp.eq.s32.totalorder %s19, 0
    %p171 = por %p169, %p170
    %p172 = scmp.ne.s32.totalorder %s160, %s161
    %p173 = scmp.eq.s32.totalorder %s20, 1
    %p174 = por %p172, %p173
    %p176 = scmp.ne.s32.totalorder %s161, %s175
    %p177 = scmp.eq.s32.totalorder %s20, 0
    %p178 = por %p176, %p177
    %s180 = sadd.s32 %s179, 1
    %p183 = scmp.eq.s32.totalorder %s14, 1
    %p184 = scmp.ne.s32.totalorder %s179, %s181
    %p185 = scmp.eq.s32.totalorder %s14, 0
    %p186 = por %p184, %p185
    %p187 = scmp.ne.s32.totalorder %s179, %s181
    %p188 = scmp.eq.s32.totalorder %s19, 1
    %p189 = por %p187, %p188
    %p190 = scmp.ne.s32.totalorder %s181, %s182
    %p191 = scmp.eq.s32.totalorder %s19, 0
    %p192 = por %p190, %p191
    %p193 = scmp.ne.s32.totalorder %s181, %s182
    %p194 = scmp.eq.s32.totalorder %s20, 1
    %p195 = por %p193, %p194
    %p197 = scmp.ne.s32.totalorder %s182, %s196
    %p198 = scmp.eq.s32.totalorder %s20, 0
    %p199 = por %p197, %p198
    %s200 = ssub.s32 %s14, %s21
    %p201 = scmp.eq.s32.totalorder %s200, 0
    %s203 = sadd.s32 %s202, 1
    %s204 = scalar_select %p201, %s202, %s203
    %p207 = pneg %p201
    %p208 = scmp.eq.s32.totalorder %s14, 1
    %p209 = por %p207, %p208
    %p210 = scmp.ne.s32.totalorder %s202, %s205
    %p211 = scmp.eq.s32.totalorder %s14, 0
    %p212 = por %p210, %p211
    %p213 = scmp.ne.s32.totalorder %s202, %s205
    %p214 = scmp.eq.s32.totalorder %s19, 1
    %p215 = por %p213, %p214
    %p216 = scmp.ne.s32.totalorder %s205, %s206
    %p217 = scmp.eq.s32.totalorder %s19, 0
    %p218 = por %p216, %p217
    %p219 = scmp.ne.s32.totalorder %s205, %s206
    %p220 = scmp.eq.s32.totalorder %s20, 1
    %p221 = por %p219, %p220
    %p223 = scmp.ne.s32.totalorder %s206, %s222
    %p224 = scmp.eq.s32.totalorder %s20, 0
    %p225 = por %p223, %p224
    %p226 = scmp.le.s32.totalorder 1, %s14
    %p227 = scmp.lt.s32.totalorder %s14, 3
    %p228 = pnand %p226, %p227
    %p229 = pneg %p228
    // Predicated region
    $region9: #{forward.1} parent=5 // pred_check
      _
    $region10: #{forward.1} parent=5 // pred_check_branch
      %231 = sbr.rel (%p228) target = $region12
    $region11: #{forward.1} parent=5 // pred_region
      %s232 = ssub.s32 %s14, 1
      // Predicated region
      $region13: #{forward.1} parent=11 // pred_check
        %p233 = pneg %p87
      $region14: #{forward.1} parent=11 // pred_check_branch
        %235 = sbr.rel (%p233) target = $region16
      $region15: #{forward.1} parent=11 // pred_region
        _
      $region16: #{forward.1} parent=11 // pred_fallthru
        _
      // Predicated region
      $region17: #{forward.1} parent=11 // pred_check
        %p236 = pneg %p108
      $region18: #{forward.1} parent=11 // pred_check_branch
        %238 = sbr.rel (%p236) target = $region20
      $region19: #{forward.1} parent=11 // pred_region
        _
      $region20: #{forward.1} parent=11 // pred_fallthru
        _
      // Predicated region
      $region21: #{forward.1} parent=11 // pred_check
        %p239 = pneg %p129
      $region22: #{forward.1} parent=11 // pred_check_branch
        %241 = sbr.rel (%p239) target = $region24
      $region23: #{forward.1} parent=11 // pred_region
        _
      $region24: #{forward.1} parent=11 // pred_fallthru
        _
      // Predicated region
      $region25: #{forward.1} parent=11 // pred_check
        %p242 = pneg %p150
      $region26: #{forward.1} parent=11 // pred_check_branch
        %244 = sbr.rel (%p242) target = $region28
      $region27: #{forward.1} parent=11 // pred_region
        _
      $region28: #{forward.1} parent=11 // pred_fallthru
        _
      // Predicated region
      $region29: #{forward.1} parent=11 // pred_check
        %p245 = pneg %p171
      $region30: #{forward.1} parent=11 // pred_check_branch
        %247 = sbr.rel (%p245) target = $region32
      $region31: #{forward.1} parent=11 // pred_region
        _
      $region32: #{forward.1} parent=11 // pred_fallthru
        _
      // Predicated region
      $region33: #{forward.1} parent=11 // pred_check
        %p248 = pneg %p192
      $region34: #{forward.1} parent=11 // pred_check_branch
        %250 = sbr.rel (%p248) target = $region36
      $region35: #{forward.1} parent=11 // pred_region
        _
      $region36: #{forward.1} parent=11 // pred_fallthru
        _
    $region12: #{forward.1} parent=5 // pred_fallthru
      _
    %p251 = scmp.lt.s32.totalorder %s14, 2
    // Predicated region
    $region37: #{forward.1} parent=5 // pred_check
      %p252 = pneg %p251
    $region38: #{forward.1} parent=5 // pred_check_branch
      %254 = sbr.rel (%p252) target = $region40
    $region39: #{forward.1} parent=5 // pred_region
      // Predicated region
      $region41: #{forward.1} parent=39 // pred_check
        %p255 = pneg %p34
      $region42: #{forward.1} parent=39 // pred_check_branch
        %257 = sbr.rel (%p255) target = $region44
      $region43: #{forward.1} parent=39 // pred_region
        %p258 = scmp.lt.s32.totalorder %s14, 1
        %s259 = scalar_select %p258, %s14, 1
        %s260 = smul.addr %s259, 8
        %s261 = smul.addr %s260, 4
        %s262 = scalar_lea.vmem %s0, %s261
      $region44: #{forward.1} parent=39 // pred_fallthru
        _
      // Predicated region
      $region45: #{forward.1} parent=39 // pred_check
        %p263 = pneg %p60
      $region46: #{forward.1} parent=39 // pred_check_branch
        %265 = sbr.rel (%p263) target = $region48
      $region47: #{forward.1} parent=39 // pred_region
        %p266 = scmp.lt.s32.totalorder %s14, 1
        %s267 = scalar_select %p266, %s14, 1
        %s268 = smul.addr %s267, 8
        %s269 = smul.addr %s268, 4
        %s270 = scalar_lea.vmem %s1, %s269
      $region48: #{forward.1} parent=39 // pred_fallthru
        _
    $region40: #{forward.1} parent=5 // pred_fallthru
      _
    %p271 = scmp.le.s32.totalorder 1, %s14
    %p272 = scmp.lt.s32.totalorder %s14, 3
    %p273 = pnand %p271, %p272
    %p274 = pneg %p273
    // Predicated region
    $region49: #{forward.1} parent=5 // pred_check
      _
    $region50: #{forward.1} parent=5 // pred_check_branch
      %276 = sbr.rel (%p273) target = $region52
    $region51: #{forward.1} parent=5 // pred_region
      %s277 = ssub.s32 %s14, 1
      %p278 = scmp.lt.s32.totalorder %s19, 1
      %s279 = scalar_select %p278, %s19, 1
      %s280 = smul.addr %s279, 8
      %s281 = smul.addr %s280, 4
      %s282 = scalar_lea.vmem %s0, %s281
      %p283 = pneg %p40
      %p284 = pneg %p37
      %p285 = scmp.lt.s32.totalorder %s19, 1
      %s286 = scalar_select %p285, %s19, 1
      %s287 = smul.addr %s286, 8
      %s288 = smul.addr %s287, 4
      %s289 = scalar_lea.vmem %s1, %s288
      %p290 = pneg %p66
      %p291 = pneg %p63
      %p292 = pneg %p87
      %p293 = pneg %p84
      %p294 = pneg %p108
      %p295 = pneg %p105
      %p296 = pneg %p129
      %p297 = pneg %p126
      %p298 = pneg %p150
      %p299 = pneg %p147
      %p300 = pneg %p171
      %p301 = pneg %p168
      %p302 = pneg %p192
      %p303 = pneg %p189
      %p304 = pneg %p218
      %p305 = pneg %p215
      %p306 = scmp.lt.s32.totalorder %s19, 1
      %s307 = scalar_select %p306, %s19, 1
      %s308 = smul.addr %s307, 8
      %s309 = smul.addr %s308, 8
      %s310 = scalar_lea.vmem %s8, %s309
      %p311 = scmp.lt.s32.totalorder %s19, 1
      %s312 = scalar_select %p311, %s19, 1
      %s313 = smul.addr %s312, 8
      %s314 = smul.addr %s313, 4
      %s315 = scalar_lea.vmem %s0, %s314
      %p316 = scmp.lt.s32.totalorder %s19, 1
      %s317 = scalar_select %p316, %s19, 1
      %s318 = smul.addr %s317, 8
      %s319 = smul.addr %s318, 4
      %s320 = scalar_lea.vmem %s1, %s319
      %p321 = scmp.lt.s32.totalorder %s19, 1
      %s322 = scalar_select %p321, %s19, 1
      %s323 = smul.addr %s322, 8
      %s324 = smul.addr %s323, 8
      %s325 = scalar_lea.vmem %s8, %s324
      %v329 = vlaneseq
      %v330 = vshrl.u32 %v329, 7
      %v331 = vadd.s32 %v330, 8
      %v332 = vadd.s32 %v330, 16
      %v333 = vadd.s32 %v330, 24
      %v334 = vadd.s32 %v330, 32
      %v335 = vadd.s32 %v330, 40
      %v336 = vadd.s32 %v330, 48
      %v337 = vadd.s32 %v330, 56
      %v338 = vlaneseq
      %v339 = vand.u32 %v338, 127
      %vm340 = vcmp.eq.s32.totalorder %v330, %v339
      %vm341 = vcmp.eq.s32.totalorder %v331, %v339
      %vm342 = vcmp.eq.s32.totalorder %v332, %v339
      %vm343 = vcmp.eq.s32.totalorder %v333, %v339
      %vm344 = vcmp.eq.s32.totalorder %v334, %v339
      %vm345 = vcmp.eq.s32.totalorder %v335, %v339
      %vm346 = vcmp.eq.s32.totalorder %v336, %v339
      %vm347 = vcmp.eq.s32.totalorder %v337, %v339
      %v348 = vld [vmem:[%s320] sm:$0xf]
      %v349 = vld [vmem:[%s320 + $0x4] sm:$0xf]
      %v350 = vld [vmem:[%s320 + $0x8] sm:$0xf]
      %v351 = vld [vmem:[%s320 + $0xc] sm:$0xf]
      %v352 = vld [vmem:[%s320 + $0x10] sm:$0xf]
      %v353 = vld [vmem:[%s320 + $0x14] sm:$0xf]
      %v354 = vld [vmem:[%s320 + $0x18] sm:$0xf]
      %v355 = vld [vmem:[%s320 + $0x1c] sm:$0xf]
      %vm356 = vcmp.gt.bf16.partialorder %v348, 0
      %vm357 = vcmp.gt.bf16.partialorder %v349, 0
      %vm358 = vcmp.gt.bf16.partialorder %v350, 0
      %vm359 = vcmp.gt.bf16.partialorder %v351, 0
      %vm360 = vcmp.gt.bf16.partialorder %v352, 0
      %vm361 = vcmp.gt.bf16.partialorder %v353, 0
      %vm362 = vcmp.gt.bf16.partialorder %v354, 0
      %vm363 = vcmp.gt.bf16.partialorder %v355, 0
      %v364 = vld [vmem:[%s315] sm:$0xf]
      %v365 = vld [vmem:[%s315 + $0x4] sm:$0xf]
      %v366 = vld [vmem:[%s315 + $0x8] sm:$0xf]
      %v367 = vld [vmem:[%s315 + $0xc] sm:$0xf]
      %v368 = vld [vmem:[%s315 + $0x10] sm:$0xf]
      %v369 = vld [vmem:[%s315 + $0x14] sm:$0xf]
      %v370 = vld [vmem:[%s315 + $0x18] sm:$0xf]
      %v371 = vld [vmem:[%s315 + $0x1c] sm:$0xf]
      %v372 = vld [vmem:[%s2] sm:$0xff]
      %v373 = vld [vmem:[%s2 + $0x8] sm:$0xff]
      %v374 = vld [vmem:[%s3] sm:$0x3]
      %v376 = vlaneseq
      %v377 = vshrl.u32 %v376, 7
      %v378 = vsub.s32 0, %v377
      %v379 = vrot.slane %v374, %v378
      %v380 = vlaneseq
      %v381 = vshrl.u32 %v380, 7
      %v382 = vsub.s32 1, %v381
      %v383 = vrot.slane %v374, %v382
      %v394 = vunpack.c.l.b16 %v364
      %v395 = vunpack.c.l.b16 %v365
      %v396 = vunpack.c.l.b16 %v366
      %v397 = vunpack.c.l.b16 %v367
      %v398 = vunpack.c.l.b16 %v368
      %v399 = vunpack.c.l.b16 %v369
      %v400 = vunpack.c.l.b16 %v370
      %v401 = vunpack.c.l.b16 %v371
      %v402 = vpack.c.b16 %v395, %v394
      %v403 = vpack.c.b16 %v397, %v396
      %v404 = vpack.c.b16 %v399, %v398
      %v405 = vpack.c.b16 %v401, %v400
      %v408 = vunpack.c.l.b16 %v372
      %v409 = vunpack.c.h.b16 %v372
      %v410 = vunpack.c.l.b16 %v373
      %v411 = vunpack.c.h.b16 %v373
      %v412 = vpack.c.b16 %v410, %v408
      %v413 = vpack.c.b16 %v411, %v409
      %vm416 = vcmask 130048
      %v418 = vsel %vm416, %v402, 0
      %v421 = vsel %vm416, %v403, 0
      %v424 = vsel %vm416, %v404, 0
      %v427 = vsel %vm416, %v405, 0
      %429 = vmatprep.subr.bf16.mxu0 0
      %430 = vmatpush1.bf16.msra.mxu0 0
      %431 = vmatprep.subr.bf16.mxu0 0
      %432 = vmatpush1.bf16.msra.mxu0 0
      %433 = vmatprep.subr.bf16.mxu0 0
      %434 = vmatpush1.bf16.msra.mxu0 0
      %435 = vmatprep.subr.bf16.mxu0 0
      %436 = vmatpush1.bf16.msra.mxu0 0
      %437 = vmatprep.subr.bf16.mxu0 0
      %438 = vmatpush1.bf16.msra.mxu0 0
      %439 = vmatprep.subr.bf16.mxu0 0
      %440 = vmatpush1.bf16.msra.mxu0 0
      %441 = vmatprep.subr.bf16.mxu0 0
      %442 = vmatpush1.bf16.msra.mxu0 0
      %443 = vmatprep.subr.bf16.mxu0 %v413
      %444 = vmatpush1.bf16.msra.mxu0 %v412
      %445 = vmatprep.subr.bf16.mxu0 0
      %446 = vmatpush2.bf16.msra.mxu0 0
      %447 = vmatprep.subr.bf16.mxu0 0
      %448 = vmatpush2.bf16.msra.mxu0 0
      %449 = vmatprep.subr.bf16.mxu0 0
      %450 = vmatpush2.bf16.msra.mxu0 0
      %451 = vmatprep.subr.bf16.mxu0 0
      %452 = vmatpush2.bf16.msra.mxu0 0
      %453 = vmatprep.subr.bf16.mxu0 0
      %454 = vmatpush2.bf16.msra.mxu0 0
      %455 = vmatprep.subr.bf16.mxu0 0
      %456 = vmatpush2.bf16.msra.mxu0 0
      %457 = vmatprep.subr.bf16.mxu0 0
      %458 = vmatpush2.bf16.msra.mxu0 0
      %459 = vmatprep.subr.bf16.mxu0 0
      %460 = vmatpush2.bf16.msra.mxu0 0
      %461 = vmatprep.mubr.bf16.mxu0 0
      %462 = vmatmul.mubr.bf16.gmra.mxu0 %v418
      %v463 = vpop.f32.mrf.mxu0
      %v464 = vadd.f32 %v379, %v463
      %v465 = vpop.f32.mrf.mxu0
      %v466 = vadd.f32 %v383, %v465
      %v467 = vpop.f32.mrf.mxu0
      %v468 = vadd.f32 %v379, %v467
      %v469 = vpop.f32.mrf.mxu0
      %v470 = vadd.f32 %v383, %v469
      %471 = vmatprep.mubr.bf16.mxu0 0
      %472 = vmatmul.mubr.bf16.gmra.mxu0 %v421
      %v473 = vpop.f32.mrf.mxu0
      %v474 = vadd.f32 %v379, %v473
      %v475 = vpop.f32.mrf.mxu0
      %v476 = vadd.f32 %v383, %v475
      %v477 = vpop.f32.mrf.mxu0
      %v478 = vadd.f32 %v379, %v477
      %v479 = vpop.f32.mrf.mxu0
      %v480 = vadd.f32 %v383, %v479
      %481 = vmatprep.mubr.bf16.mxu0 0
      %482 = vmatmul.mubr.bf16.gmra.mxu0 %v424
      %v483 = vpop.f32.mrf.mxu0
      %v484 = vadd.f32 %v379, %v483
      %v485 = vpop.f32.mrf.mxu0
      %v486 = vadd.f32 %v383, %v485
      %v487 = vpop.f32.mrf.mxu0
      %v488 = vadd.f32 %v379, %v487
      %v489 = vpop.f32.mrf.mxu0
      %v490 = vadd.f32 %v383, %v489
      %491 = vmatprep.mubr.bf16.mxu0 0
      %492 = vmatmul.mubr.bf16.gmra.mxu0 %v427
      %v493 = vpop.f32.mrf.mxu0
      %v494 = vadd.f32 %v379, %v493
      %v495 = vpop.f32.mrf.mxu0
      %v496 = vadd.f32 %v383, %v495
      %v497 = vpop.f32.mrf.mxu0
      %v498 = vadd.f32 %v379, %v497
      %v499 = vpop.f32.mrf.mxu0
      %v500 = vadd.f32 %v383, %v499
      %501 = vdwg.mxu0
      %503 = vset.pattern.permute.xlu0 1
      %504 = vperm.xlu0 %503, %v466
      %v505 = vpop.permute.xlu0 %504
      %508 = vset.pattern.permute.xlu0 1
      %509 = vperm.xlu0 %508, %v470
      %v510 = vpop.permute.xlu0 %509
      %513 = vset.pattern.permute.xlu0 1
      %514 = vperm.xlu0 %513, %v476
      %v515 = vpop.permute.xlu0 %514
      %518 = vset.pattern.permute.xlu0 1
      %519 = vperm.xlu0 %518, %v480
      %v520 = vpop.permute.xlu0 %519
      %523 = vset.pattern.permute.xlu0 1
      %524 = vperm.xlu0 %523, %v486
      %v525 = vpop.permute.xlu0 %524
      %528 = vset.pattern.permute.xlu0 1
      %529 = vperm.xlu0 %528, %v490
      %v530 = vpop.permute.xlu0 %529
      %533 = vset.pattern.permute.xlu0 1
      %534 = vperm.xlu0 %533, %v496
      %v535 = vpop.permute.xlu0 %534
      %538 = vset.pattern.permute.xlu0 1
      %539 = vperm.xlu0 %538, %v500
      %v540 = vpop.permute.xlu0 %539
      %v542 = vsel %vm340, %v505, 0.0
      %v543 = vsel %vm341, %v510, 0.0
      %v544 = vsel %vm342, %v515, 0.0
      %v545 = vsel %vm343, %v520, 0.0
      %v546 = vsel %vm344, %v525, 0.0
      %v547 = vsel %vm345, %v530, 0.0
      %v548 = vsel %vm346, %v535, 0.0
      %v549 = vsel %vm347, %v540, 0.0
      %vm550 = vcmask 523264
      %v551 = vsel %vm550, %v542, 0.0
      %v552 = vsel %vm550, %v543, 0.0
      %v553 = vadd.f32 %v551, %v552
      %v554 = vsel %vm550, %v544, 0.0
      %v555 = vadd.f32 %v553, %v554
      %v556 = vsel %vm550, %v545, 0.0
      %v557 = vadd.f32 %v555, %v556
      %v558 = vsel %vm550, %v546, 0.0
      %v559 = vadd.f32 %v557, %v558
      %v560 = vsel %vm550, %v547, 0.0
      %v561 = vadd.f32 %v559, %v560
      %v562 = vsel %vm550, %v548, 0.0
      %v563 = vadd.f32 %v561, %v562
      %v564 = vsel %vm550, %v549, 0.0
      %v565 = vadd.f32 %v563, %v564
      %v566 = vrot.slane %v565, 4
      %v567 = vadd.f32 %v565, %v566
      %v568 = vrot.slane %v567, 2
      %v569 = vadd.f32 %v567, %v568
      %v570 = vrot.slane %v569, 1
      %v571 = vadd.f32 %v569, %v570
      %572 = vset.pattern.permute.xlu0 0
      %573 = vperm.xlu0 %572, %v466
      %v574 = vpop.permute.xlu0 %573
      %576 = vset.pattern.permute.xlu0 0
      %577 = vperm.xlu0 %576, %v470
      %v578 = vpop.permute.xlu0 %577
      %580 = vset.pattern.permute.xlu0 0
      %581 = vperm.xlu0 %580, %v476
      %v582 = vpop.permute.xlu0 %581
      %584 = vset.pattern.permute.xlu0 0
      %585 = vperm.xlu0 %584, %v480
      %v586 = vpop.permute.xlu0 %585
      %588 = vset.pattern.permute.xlu0 0
      %589 = vperm.xlu0 %588, %v486
      %v590 = vpop.permute.xlu0 %589
      %592 = vset.pattern.permute.xlu0 0
      %593 = vperm.xlu0 %592, %v490
      %v594 = vpop.permute.xlu0 %593
      %596 = vset.pattern.permute.xlu0 0
      %597 = vperm.xlu0 %596, %v496
      %v598 = vpop.permute.xlu0 %597
      %600 = vset.pattern.permute.xlu0 0
      %601 = vperm.xlu0 %600, %v500
      %v602 = vpop.permute.xlu0 %601
      %v604 = vadd.f32 %v574, %v571
      %v605 = vadd.f32 %v578, %v571
      %v606 = vadd.f32 %v582, %v571
      %v607 = vadd.f32 %v586, %v571
      %v608 = vadd.f32 %v590, %v571
      %v609 = vadd.f32 %v594, %v571
      %v610 = vadd.f32 %v598, %v571
      %v611 = vadd.f32 %v602, %v571
      %vm612 = vcmp.ge.f32.partialorder %v604, 0.0
      %vm613 = vcmp.ge.f32.partialorder %v605, 0.0
      %vm614 = vcmp.ge.f32.partialorder %v606, 0.0
      %vm615 = vcmp.ge.f32.partialorder %v607, 0.0
      %vm616 = vcmp.ge.f32.partialorder %v608, 0.0
      %vm617 = vcmp.ge.f32.partialorder %v609, 0.0
      %vm618 = vcmp.ge.f32.partialorder %v610, 0.0
      %vm619 = vcmp.ge.f32.partialorder %v611, 0.0
      %v620 = vmul.f32 %v604, 0.2
      %v621 = vmul.f32 %v605, 0.2
      %v622 = vmul.f32 %v606, 0.2
      %v623 = vmul.f32 %v607, 0.2
      %v624 = vmul.f32 %v608, 0.2
      %v625 = vmul.f32 %v609, 0.2
      %v626 = vmul.f32 %v610, 0.2
      %v627 = vmul.f32 %v611, 0.2
      %v628 = vsel %vm612, %v604, %v620
      %v629 = vsel %vm613, %v605, %v621
      %v630 = vsel %vm614, %v606, %v622
      %v631 = vsel %vm615, %v607, %v623
      %v632 = vsel %vm616, %v608, %v624
      %v633 = vsel %vm617, %v609, %v625
      %v634 = vsel %vm618, %v610, %v626
      %v635 = vsel %vm619, %v611, %v627
      %v636 = vsel %vm356, 65537, 0
      %v637 = vsel %vm357, 65537, 0
      %v638 = vsel %vm358, 65537, 0
      %v639 = vsel %vm359, 65537, 0
      %v640 = vsel %vm360, 65537, 0
      %v641 = vsel %vm361, 65537, 0
      %v642 = vsel %vm362, 65537, 0
      %v643 = vsel %vm363, 65537, 0
      %v644 = vunpack.c.l.b16 %v636
      %v645 = vunpack.c.l.b16 %v637
      %v646 = vunpack.c.l.b16 %v638
      %v647 = vunpack.c.l.b16 %v639
      %v648 = vunpack.c.l.b16 %v640
      %v649 = vunpack.c.l.b16 %v641
      %v650 = vunpack.c.l.b16 %v642
      %v651 = vunpack.c.l.b16 %v643
      %vm652 = vcmp.ne.s32.totalorder %v644, 0
      %vm653 = vcmp.ne.s32.totalorder %v645, 0
      %vm654 = vcmp.ne.s32.totalorder %v646, 0
      %vm655 = vcmp.ne.s32.totalorder %v647, 0
      %vm656 = vcmp.ne.s32.totalorder %v648, 0
      %vm657 = vcmp.ne.s32.totalorder %v649, 0
      %vm658 = vcmp.ne.s32.totalorder %v650, 0
      %vm659 = vcmp.ne.s32.totalorder %v651, 0
      %v660 = vsel %vm652, %v628, -1e+30
      %v661 = vsel %vm653, %v629, -1e+30
      %v662 = vsel %vm654, %v630, -1e+30
      %v663 = vsel %vm655, %v631, -1e+30
      %v664 = vsel %vm656, %v632, -1e+30
      %v665 = vsel %vm657, %v633, -1e+30
      %v666 = vsel %vm658, %v634, -1e+30
      %v667 = vsel %vm659, %v635, -1e+30
      %v668 = vsel %vm550, %v660, -inf
      %669 = vmax.xlane.f32.xlu0 %v668
      %v670 = vpop.xlane.xlu0 %669
      %v671 = vsel %vm550, %v661, -inf
      %672 = vmax.xlane.f32.xlu0 %v671
      %v673 = vpop.xlane.xlu0 %672
      %v674 = vsel %vm550, %v662, -inf
      %675 = vmax.xlane.f32.xlu0 %v674
      %v676 = vpop.xlane.xlu0 %675
      %v677 = vsel %vm550, %v663, -inf
      %678 = vmax.xlane.f32.xlu0 %v677
      %v679 = vpop.xlane.xlu0 %678
      %v680 = vsel %vm550, %v664, -inf
      %681 = vmax.xlane.f32.xlu0 %v680
      %v682 = vpop.xlane.xlu0 %681
      %v683 = vsel %vm550, %v665, -inf
      %684 = vmax.xlane.f32.xlu0 %v683
      %v685 = vpop.xlane.xlu0 %684
      %v686 = vsel %vm550, %v666, -inf
      %687 = vmax.xlane.f32.xlu0 %v686
      %v688 = vpop.xlane.xlu0 %687
      %v689 = vsel %vm550, %v667, -inf
      %690 = vmax.xlane.f32.xlu0 %v689
      %v691 = vpop.xlane.xlu0 %690
      %v692 = vsub.f32 %v660, %v670
      %v693 = vsub.f32 %v661, %v673
      %v694 = vsub.f32 %v662, %v676
      %v695 = vsub.f32 %v663, %v679
      %v696 = vsub.f32 %v664, %v682
      %v697 = vsub.f32 %v665, %v685
      %v698 = vsub.f32 %v666, %v688
      %v699 = vsub.f32 %v667, %v691
      %v700 = vmul.f32 %v692, 1.442695
      %v701 = vpow.pop %v700
      %v702 = vmul.f32 %v693, 1.442695
      %v703 = vpow.pop %v702
      %v704 = vmul.f32 %v694, 1.442695
      %v705 = vpow.pop %v704
      %v706 = vmul.f32 %v695, 1.442695
      %v707 = vpow.pop %v706
      %v708 = vmul.f32 %v696, 1.442695
      %v709 = vpow.pop %v708
      %v710 = vmul.f32 %v697, 1.442695
      %v711 = vpow.pop %v710
      %v712 = vmul.f32 %v698, 1.442695
      %v713 = vpow.pop %v712
      %v714 = vmul.f32 %v699, 1.442695
      %v715 = vpow.pop %v714
      %v716 = vsel %vm550, %v701, 0.0
      %717 = vadd.xlane.f32.xlu0 %v716
      %v718 = vpop.xlane.xlu0 %717
      %v719 = vsel %vm550, %v703, 0.0
      %720 = vadd.xlane.f32.xlu0 %v719
      %v721 = vpop.xlane.xlu0 %720
      %v722 = vsel %vm550, %v705, 0.0
      %723 = vadd.xlane.f32.xlu0 %v722
      %v724 = vpop.xlane.xlu0 %723
      %v725 = vsel %vm550, %v707, 0.0
      %726 = vadd.xlane.f32.xlu0 %v725
      %v727 = vpop.xlane.xlu0 %726
      %v728 = vsel %vm550, %v709, 0.0
      %729 = vadd.xlane.f32.xlu0 %v728
      %v730 = vpop.xlane.xlu0 %729
      %v731 = vsel %vm550, %v711, 0.0
      %732 = vadd.xlane.f32.xlu0 %v731
      %v733 = vpop.xlane.xlu0 %732
      %v734 = vsel %vm550, %v713, 0.0
      %735 = vadd.xlane.f32.xlu0 %v734
      %v736 = vpop.xlane.xlu0 %735
      %v737 = vsel %vm550, %v715, 0.0
      %738 = vadd.xlane.f32.xlu0 %v737
      %v739 = vpop.xlane.xlu0 %738
      %v740 = vrcp.pop %v718
      %v741 = vmul.f32 %v701, %v740
      %v742 = vrcp.pop %v721
      %v743 = vmul.f32 %v703, %v742
      %v744 = vrcp.pop %v724
      %v745 = vmul.f32 %v705, %v744
      %v746 = vrcp.pop %v727
      %v747 = vmul.f32 %v707, %v746
      %v748 = vrcp.pop %v730
      %v749 = vmul.f32 %v709, %v748
      %v750 = vrcp.pop %v733
      %v751 = vmul.f32 %v711, %v750
      %v752 = vrcp.pop %v736
      %v753 = vmul.f32 %v713, %v752
      %v754 = vrcp.pop %v739
      %v755 = vmul.f32 %v715, %v754
      %v756 = vpack.c.bf16 %v743, %v741
      %v757 = vpack.c.bf16 %v747, %v745
      %v758 = vpack.c.bf16 %v751, %v749
      %v759 = vpack.c.bf16 %v755, %v753
      %v760 = vpack.c.bf16 %v468, %v464
      %v761 = vpack.c.bf16 %v478, %v474
      %v762 = vpack.c.bf16 %v488, %v484
      %v763 = vpack.c.bf16 %v498, %v494
      %v765 = vsel %vm550, %v756, 0
      %v768 = vsel %vm550, %v757, 0
      %v771 = vsel %vm550, %v758, 0
      %v774 = vsel %vm550, %v759, 0
      %776 = vmatprep.subr.bf16.mxu0 0
      %777 = vmatpush1.bf16.msra.mxu0 0
      %778 = vmatprep.subr.bf16.mxu0 0
      %779 = vmatpush1.bf16.msra.mxu0 0
      %780 = vmatprep.subr.bf16.mxu0 0
      %781 = vmatpush1.bf16.msra.mxu0 0
      %782 = vmatprep.subr.bf16.mxu0 0
      %783 = vmatpush1.bf16.msra.mxu0 0
      %784 = vmatprep.subr.bf16.mxu0 0
      %785 = vmatpush1.bf16.msra.mxu0 %v763
      %786 = vmatprep.subr.bf16.mxu0 0
      %787 = vmatpush1.bf16.msra.mxu0 %v762
      %788 = vmatprep.subr.bf16.mxu0 0
      %789 = vmatpush1.bf16.msra.mxu0 %v761
      %790 = vmatprep.subr.bf16.mxu0 0
      %791 = vmatpush1.bf16.msra.mxu0 %v760
      %792 = vmatprep.subr.bf16.mxu0 0
      %793 = vmatpush2.bf16.msra.mxu0 0
      %794 = vmatprep.subr.bf16.mxu0 0
      %795 = vmatpush2.bf16.msra.mxu0 0
      %796 = vmatprep.subr.bf16.mxu0 0
      %797 = vmatpush2.bf16.msra.mxu0 0
      %798 = vmatprep.subr.bf16.mxu0 0
      %799 = vmatpush2.bf16.msra.mxu0 0
      %800 = vmatprep.subr.bf16.mxu0 0
      %801 = vmatpush2.bf16.msra.mxu0 0
      %802 = vmatprep.subr.bf16.mxu0 0
      %803 = vmatpush2.bf16.msra.mxu0 0
      %804 = vmatprep.subr.bf16.mxu0 0
      %805 = vmatpush2.bf16.msra.mxu0 0
      %806 = vmatprep.subr.bf16.mxu0 0
      %807 = vmatpush2.bf16.msra.mxu0 0
      %808 = vmatprep.mubr.bf16.mxu0 0
      %809 = vmatmul.mubr.bf16.gmra.mxu0 %v765
      %v810 = vpop.f32.mrf.mxu0
      %v811 = vadd.f32 0.0, %v810
      %v812 = vpop.f32.mrf.mxu0
      %v813 = vpop.f32.mrf.mxu0
      %v814 = vadd.f32 0.0, %v813
      %v815 = vpop.f32.mrf.mxu0
      %816 = vmatprep.mubr.bf16.mxu0 0
      %817 = vmatmul.mubr.bf16.gmra.mxu0 %v768
      %v818 = vpop.f32.mrf.mxu0
      %v819 = vadd.f32 0.0, %v818
      %v820 = vpop.f32.mrf.mxu0
      %v821 = vpop.f32.mrf.mxu0
      %v822 = vadd.f32 0.0, %v821
      %v823 = vpop.f32.mrf.mxu0
      %824 = vmatprep.mubr.bf16.mxu0 0
      %825 = vmatmul.mubr.bf16.gmra.mxu0 %v771
      %v826 = vpop.f32.mrf.mxu0
      %v827 = vadd.f32 0.0, %v826
      %v828 = vpop.f32.mrf.mxu0
      %v829 = vpop.f32.mrf.mxu0
      %v830 = vadd.f32 0.0, %v829
      %v831 = vpop.f32.mrf.mxu0
      %832 = vmatprep.mubr.bf16.mxu0 0
      %833 = vmatmul.mubr.bf16.gmra.mxu0 %v774
      %v834 = vpop.f32.mrf.mxu0
      %v835 = vadd.f32 0.0, %v834
      %v836 = vpop.f32.mrf.mxu0
      %v837 = vpop.f32.mrf.mxu0
      %v838 = vadd.f32 0.0, %v837
      %v839 = vpop.f32.mrf.mxu0
      %840 = vdwg.mxu0
      %v841 = vmax.f32 %v811, 0.0
      %v842 = vmax.f32 %v814, 0.0
      %v843 = vmax.f32 %v819, 0.0
      %v844 = vmax.f32 %v822, 0.0
      %v845 = vmax.f32 %v827, 0.0
      %v846 = vmax.f32 %v830, 0.0
      %v847 = vmax.f32 %v835, 0.0
      %v848 = vmax.f32 %v838, 0.0
      %v849 = vpack.c.bf16 %v842, %v841
      %v850 = vpack.c.bf16 %v844, %v843
      %v851 = vpack.c.bf16 %v846, %v845
      %v852 = vpack.c.bf16 %v848, %v847
      %v853 = vld [vmem:[%s4] sm:$0xf]
      %v854 = vld [vmem:[%s4 + $0x4] sm:$0xf]
      %v855 = vld [vmem:[%s4 + $0x8] sm:$0xf]
      %v856 = vld [vmem:[%s4 + $0xc] sm:$0xf]
      %v857 = vld [vmem:[%s4 + $0x10] sm:$0xf]
      %v858 = vld [vmem:[%s4 + $0x14] sm:$0xf]
      %v859 = vld [vmem:[%s4 + $0x18] sm:$0xf]
      %v860 = vld [vmem:[%s4 + $0x1c] sm:$0xf]
      %v861 = vld [vmem:[%s4 + $0x20] sm:$0xf]
      %v862 = vld [vmem:[%s4 + $0x24] sm:$0xf]
      %v863 = vld [vmem:[%s4 + $0x28] sm:$0xf]
      %v864 = vld [vmem:[%s4 + $0x2c] sm:$0xf]
      %v865 = vld [vmem:[%s4 + $0x30] sm:$0xf]
      %v866 = vld [vmem:[%s4 + $0x34] sm:$0xf]
      %v867 = vld [vmem:[%s4 + $0x38] sm:$0xf]
      %v868 = vld [vmem:[%s4 + $0x3c] sm:$0xf]
      %v869 = vld [vmem:[%s5] sm:$0x1]
      %v871 = vlaneseq
      %v872 = vshrl.u32 %v871, 7
      %v873 = vsub.s32 0, %v872
      %v874 = vrot.slane %v869, %v873
      %v892 = vunpack.c.l.b16 %v853
      %v893 = vunpack.c.l.b16 %v854
      %v894 = vunpack.c.l.b16 %v855
      %v895 = vunpack.c.l.b16 %v856
      %v896 = vunpack.c.l.b16 %v857
      %v897 = vunpack.c.l.b16 %v858
      %v898 = vunpack.c.l.b16 %v859
      %v899 = vunpack.c.l.b16 %v860
      %v900 = vunpack.c.l.b16 %v861
      %v901 = vunpack.c.l.b16 %v862
      %v902 = vunpack.c.l.b16 %v863
      %v903 = vunpack.c.l.b16 %v864
      %v904 = vunpack.c.l.b16 %v865
      %v905 = vunpack.c.l.b16 %v866
      %v906 = vunpack.c.l.b16 %v867
      %v907 = vunpack.c.l.b16 %v868
      %v908 = vpack.c.b16 %v893, %v892
      %v909 = vpack.c.b16 %v895, %v894
      %v910 = vpack.c.b16 %v897, %v896
      %v911 = vpack.c.b16 %v899, %v898
      %v912 = vpack.c.b16 %v901, %v900
      %v913 = vpack.c.b16 %v903, %v902
      %v914 = vpack.c.b16 %v905, %v904
      %v915 = vpack.c.b16 %v907, %v906
      %924 = vmatprep.subr.bf16.mxu0 0
      %925 = vmatpush1.bf16.msra.mxu0 %v915
      %926 = vmatprep.subr.bf16.mxu0 0
      %927 = vmatpush1.bf16.msra.mxu0 %v914
      %928 = vmatprep.subr.bf16.mxu0 0
      %929 = vmatpush1.bf16.msra.mxu0 %v913
      %930 = vmatprep.subr.bf16.mxu0 0
      %931 = vmatpush1.bf16.msra.mxu0 %v912
      %932 = vmatprep.subr.bf16.mxu0 0
      %933 = vmatpush1.bf16.msra.mxu0 %v911
      %934 = vmatprep.subr.bf16.mxu0 0
      %935 = vmatpush1.bf16.msra.mxu0 %v910
      %936 = vmatprep.subr.bf16.mxu0 0
      %937 = vmatpush1.bf16.msra.mxu0 %v909
      %938 = vmatprep.subr.bf16.mxu0 0
      %939 = vmatpush1.bf16.msra.mxu0 %v908
      %940 = vmatprep.subr.bf16.mxu0 0
      %941 = vmatpush2.bf16.msra.mxu0 0
      %942 = vmatprep.subr.bf16.mxu0 0
      %943 = vmatpush2.bf16.msra.mxu0 0
      %944 = vmatprep.subr.bf16.mxu0 0
      %945 = vmatpush2.bf16.msra.mxu0 0
      %946 = vmatprep.subr.bf16.mxu0 0
      %947 = vmatpush2.bf16.msra.mxu0 0
      %948 = vmatprep.subr.bf16.mxu0 0
      %949 = vmatpush2.bf16.msra.mxu0 0
      %950 = vmatprep.subr.bf16.mxu0 0
      %951 = vmatpush2.bf16.msra.mxu0 0
      %952 = vmatprep.subr.bf16.mxu0 0
      %953 = vmatpush2.bf16.msra.mxu0 0
      %954 = vmatprep.subr.bf16.mxu0 0
      %955 = vmatpush2.bf16.msra.mxu0 0
      %956 = vmatprep.mubr.bf16.mxu0 0
      %957 = vmatmul.mubr.bf16.gmra.mxu0 %v849
      %v958 = vpop.f32.mrf.mxu0
      %v959 = vadd.f32 %v874, %v958
      %v960 = vpop.f32.mrf.mxu0
      %v961 = vpop.f32.mrf.mxu0
      %v962 = vadd.f32 %v874, %v961
      %v963 = vpop.f32.mrf.mxu0
      %964 = vmatprep.mubr.bf16.mxu0 0
      %965 = vmatmul.mubr.bf16.gmra.mxu0 %v850
      %v966 = vpop.f32.mrf.mxu0
      %v967 = vadd.f32 %v874, %v966
      %v968 = vpop.f32.mrf.mxu0
      %v969 = vpop.f32.mrf.mxu0
      %v970 = vadd.f32 %v874, %v969
      %v971 = vpop.f32.mrf.mxu0
      %972 = vmatprep.mubr.bf16.mxu0 0
      %973 = vmatmul.mubr.bf16.gmra.mxu0 %v851
      %v974 = vpop.f32.mrf.mxu0
      %v975 = vadd.f32 %v874, %v974
      %v976 = vpop.f32.mrf.mxu0
      %v977 = vpop.f32.mrf.mxu0
      %v978 = vadd.f32 %v874, %v977
      %v979 = vpop.f32.mrf.mxu0
      %980 = vmatprep.mubr.bf16.mxu0 0
      %981 = vmatmul.mubr.bf16.gmra.mxu0 %v852
      %v982 = vpop.f32.mrf.mxu0
      %v983 = vadd.f32 %v874, %v982
      %v984 = vpop.f32.mrf.mxu0
      %v985 = vpop.f32.mrf.mxu0
      %v986 = vadd.f32 %v874, %v985
      %v987 = vpop.f32.mrf.mxu0
      %988 = vdwg.mxu0
      %990 = vset.pattern.permute.xlu0 65
      %991 = vperm.xlu0 %990, %v959
      %v992 = vpop.permute.xlu0 %991
      %995 = vset.pattern.permute.xlu0 65
      %996 = vperm.xlu0 %995, %v962
      %v997 = vpop.permute.xlu0 %996
      %1000 = vset.pattern.permute.xlu0 65
      %1001 = vperm.xlu0 %1000, %v967
      %v1002 = vpop.permute.xlu0 %1001
      %1005 = vset.pattern.permute.xlu0 65
      %1006 = vperm.xlu0 %1005, %v970
      %v1007 = vpop.permute.xlu0 %1006
      %1010 = vset.pattern.permute.xlu0 65
      %1011 = vperm.xlu0 %1010, %v975
      %v1012 = vpop.permute.xlu0 %1011
      %1015 = vset.pattern.permute.xlu0 65
      %1016 = vperm.xlu0 %1015, %v978
      %v1017 = vpop.permute.xlu0 %1016
      %1020 = vset.pattern.permute.xlu0 65
      %1021 = vperm.xlu0 %1020, %v983
      %v1022 = vpop.permute.xlu0 %1021
      %1025 = vset.pattern.permute.xlu0 65
      %1026 = vperm.xlu0 %1025, %v986
      %v1027 = vpop.permute.xlu0 %1026
      %v1029 = vsel %vm340, %v992, 0.0
      %v1030 = vsel %vm341, %v997, 0.0
      %v1031 = vsel %vm342, %v1002, 0.0
      %v1032 = vsel %vm343, %v1007, 0.0
      %v1033 = vsel %vm344, %v1012, 0.0
      %v1034 = vsel %vm345, %v1017, 0.0
      %v1035 = vsel %vm346, %v1022, 0.0
      %v1036 = vsel %vm347, %v1027, 0.0
      %v1037 = vsel %vm550, %v1029, 0.0
      %v1038 = vsel %vm550, %v1030, 0.0
      %v1039 = vadd.f32 %v1037, %v1038
      %v1040 = vsel %vm550, %v1031, 0.0
      %v1041 = vadd.f32 %v1039, %v1040
      %v1042 = vsel %vm550, %v1032, 0.0
      %v1043 = vadd.f32 %v1041, %v1042
      %v1044 = vsel %vm550, %v1033, 0.0
      %v1045 = vadd.f32 %v1043, %v1044
      %v1046 = vsel %vm550, %v1034, 0.0
      %v1047 = vadd.f32 %v1045, %v1046
      %v1048 = vsel %vm550, %v1035, 0.0
      %v1049 = vadd.f32 %v1047, %v1048
      %v1050 = vsel %vm550, %v1036, 0.0
      %v1051 = vadd.f32 %v1049, %v1050
      %v1052 = vrot.slane %v1051, 4
      %v1053 = vadd.f32 %v1051, %v1052
      %v1054 = vrot.slane %v1053, 2
      %v1055 = vadd.f32 %v1053, %v1054
      %v1056 = vrot.slane %v1055, 1
      %v1057 = vadd.f32 %v1055, %v1056
      %1058 = vset.pattern.permute.xlu0 64
      %1059 = vperm.xlu0 %1058, %v959
      %v1060 = vpop.permute.xlu0 %1059
      %1062 = vset.pattern.permute.xlu0 64
      %1063 = vperm.xlu0 %1062, %v962
      %v1064 = vpop.permute.xlu0 %1063
      %1066 = vset.pattern.permute.xlu0 64
      %1067 = vperm.xlu0 %1066, %v967
      %v1068 = vpop.permute.xlu0 %1067
      %1070 = vset.pattern.permute.xlu0 64
      %1071 = vperm.xlu0 %1070, %v970
      %v1072 = vpop.permute.xlu0 %1071
      %1074 = vset.pattern.permute.xlu0 64
      %1075 = vperm.xlu0 %1074, %v975
      %v1076 = vpop.permute.xlu0 %1075
      %1078 = vset.pattern.permute.xlu0 64
      %1079 = vperm.xlu0 %1078, %v978
      %v1080 = vpop.permute.xlu0 %1079
      %1082 = vset.pattern.permute.xlu0 64
      %1083 = vperm.xlu0 %1082, %v983
      %v1084 = vpop.permute.xlu0 %1083
      %1086 = vset.pattern.permute.xlu0 64
      %1087 = vperm.xlu0 %1086, %v986
      %v1088 = vpop.permute.xlu0 %1087
      %v1090 = vadd.f32 %v1060, %v1057
      %v1091 = vadd.f32 %v1064, %v1057
      %v1092 = vadd.f32 %v1068, %v1057
      %v1093 = vadd.f32 %v1072, %v1057
      %v1094 = vadd.f32 %v1076, %v1057
      %v1095 = vadd.f32 %v1080, %v1057
      %v1096 = vadd.f32 %v1084, %v1057
      %v1097 = vadd.f32 %v1088, %v1057
      %vm1098 = vcmp.ge.f32.partialorder %v1090, 0.0
      %vm1099 = vcmp.ge.f32.partialorder %v1091, 0.0
      %vm1100 = vcmp.ge.f32.partialorder %v1092, 0.0
      %vm1101 = vcmp.ge.f32.partialorder %v1093, 0.0
      %vm1102 = vcmp.ge.f32.partialorder %v1094, 0.0
      %vm1103 = vcmp.ge.f32.partialorder %v1095, 0.0
      %vm1104 = vcmp.ge.f32.partialorder %v1096, 0.0
      %vm1105 = vcmp.ge.f32.partialorder %v1097, 0.0
      %v1106 = vmul.f32 %v1090, 0.2
      %v1107 = vmul.f32 %v1091, 0.2
      %v1108 = vmul.f32 %v1092, 0.2
      %v1109 = vmul.f32 %v1093, 0.2
      %v1110 = vmul.f32 %v1094, 0.2
      %v1111 = vmul.f32 %v1095, 0.2
      %v1112 = vmul.f32 %v1096, 0.2
      %v1113 = vmul.f32 %v1097, 0.2
      %v1114 = vsel %vm1098, %v1090, %v1106
      %v1115 = vsel %vm1099, %v1091, %v1107
      %v1116 = vsel %vm1100, %v1092, %v1108
      %v1117 = vsel %vm1101, %v1093, %v1109
      %v1118 = vsel %vm1102, %v1094, %v1110
      %v1119 = vsel %vm1103, %v1095, %v1111
      %v1120 = vsel %vm1104, %v1096, %v1112
      %v1121 = vsel %vm1105, %v1097, %v1113
      %v1122 = vsel %vm652, %v1114, -1e+30
      %v1123 = vsel %vm653, %v1115, -1e+30
      %v1124 = vsel %vm654, %v1116, -1e+30
      %v1125 = vsel %vm655, %v1117, -1e+30
      %v1126 = vsel %vm656, %v1118, -1e+30
      %v1127 = vsel %vm657, %v1119, -1e+30
      %v1128 = vsel %vm658, %v1120, -1e+30
      %v1129 = vsel %vm659, %v1121, -1e+30
      %v1130 = vsel %vm550, %v1122, -inf
      %1131 = vmax.xlane.f32.xlu0 %v1130
      %v1132 = vpop.xlane.xlu0 %1131
      %v1133 = vsel %vm550, %v1123, -inf
      %1134 = vmax.xlane.f32.xlu0 %v1133
      %v1135 = vpop.xlane.xlu0 %1134
      %v1136 = vsel %vm550, %v1124, -inf
      %1137 = vmax.xlane.f32.xlu0 %v1136
      %v1138 = vpop.xlane.xlu0 %1137
      %v1139 = vsel %vm550, %v1125, -inf
      %1140 = vmax.xlane.f32.xlu0 %v1139
      %v1141 = vpop.xlane.xlu0 %1140
      %v1142 = vsel %vm550, %v1126, -inf
      %1143 = vmax.xlane.f32.xlu0 %v1142
      %v1144 = vpop.xlane.xlu0 %1143
      %v1145 = vsel %vm550, %v1127, -inf
      %1146 = vmax.xlane.f32.xlu0 %v1145
      %v1147 = vpop.xlane.xlu0 %1146
      %v1148 = vsel %vm550, %v1128, -inf
      %1149 = vmax.xlane.f32.xlu0 %v1148
      %v1150 = vpop.xlane.xlu0 %1149
      %v1151 = vsel %vm550, %v1129, -inf
      %1152 = vmax.xlane.f32.xlu0 %v1151
      %v1153 = vpop.xlane.xlu0 %1152
      %v1154 = vsub.f32 %v1122, %v1132
      %v1155 = vsub.f32 %v1123, %v1135
      %v1156 = vsub.f32 %v1124, %v1138
      %v1157 = vsub.f32 %v1125, %v1141
      %v1158 = vsub.f32 %v1126, %v1144
      %v1159 = vsub.f32 %v1127, %v1147
      %v1160 = vsub.f32 %v1128, %v1150
      %v1161 = vsub.f32 %v1129, %v1153
      %v1162 = vmul.f32 %v1154, 1.442695
      %v1163 = vpow.pop %v1162
      %v1164 = vmul.f32 %v1155, 1.442695
      %v1165 = vpow.pop %v1164
      %v1166 = vmul.f32 %v1156, 1.442695
      %v1167 = vpow.pop %v1166
      %v1168 = vmul.f32 %v1157, 1.442695
      %v1169 = vpow.pop %v1168
      %v1170 = vmul.f32 %v1158, 1.442695
      %v1171 = vpow.pop %v1170
      %v1172 = vmul.f32 %v1159, 1.442695
      %v1173 = vpow.pop %v1172
      %v1174 = vmul.f32 %v1160, 1.442695
      %v1175 = vpow.pop %v1174
      %v1176 = vmul.f32 %v1161, 1.442695
      %v1177 = vpow.pop %v1176
      %v1178 = vsel %vm550, %v1163, 0.0
      %1179 = vadd.xlane.f32.xlu0 %v1178
      %v1180 = vpop.xlane.xlu0 %1179
      %v1181 = vsel %vm550, %v1165, 0.0
      %1182 = vadd.xlane.f32.xlu0 %v1181
      %v1183 = vpop.xlane.xlu0 %1182
      %v1184 = vsel %vm550, %v1167, 0.0
      %1185 = vadd.xlane.f32.xlu0 %v1184
      %v1186 = vpop.xlane.xlu0 %1185
      %v1187 = vsel %vm550, %v1169, 0.0
      %1188 = vadd.xlane.f32.xlu0 %v1187
      %v1189 = vpop.xlane.xlu0 %1188
      %v1190 = vsel %vm550, %v1171, 0.0
      %1191 = vadd.xlane.f32.xlu0 %v1190
      %v1192 = vpop.xlane.xlu0 %1191
      %v1193 = vsel %vm550, %v1173, 0.0
      %1194 = vadd.xlane.f32.xlu0 %v1193
      %v1195 = vpop.xlane.xlu0 %1194
      %v1196 = vsel %vm550, %v1175, 0.0
      %1197 = vadd.xlane.f32.xlu0 %v1196
      %v1198 = vpop.xlane.xlu0 %1197
      %v1199 = vsel %vm550, %v1177, 0.0
      %1200 = vadd.xlane.f32.xlu0 %v1199
      %v1201 = vpop.xlane.xlu0 %1200
      %v1202 = vrcp.pop %v1180
      %v1203 = vmul.f32 %v1163, %v1202
      %v1204 = vrcp.pop %v1183
      %v1205 = vmul.f32 %v1165, %v1204
      %v1206 = vrcp.pop %v1186
      %v1207 = vmul.f32 %v1167, %v1206
      %v1208 = vrcp.pop %v1189
      %v1209 = vmul.f32 %v1169, %v1208
      %v1210 = vrcp.pop %v1192
      %v1211 = vmul.f32 %v1171, %v1210
      %v1212 = vrcp.pop %v1195
      %v1213 = vmul.f32 %v1173, %v1212
      %v1214 = vrcp.pop %v1198
      %v1215 = vmul.f32 %v1175, %v1214
      %v1216 = vrcp.pop %v1201
      %v1217 = vmul.f32 %v1177, %v1216
      %v1218 = vpack.c.bf16 %v1205, %v1203
      %v1219 = vpack.c.bf16 %v1209, %v1207
      %v1220 = vpack.c.bf16 %v1213, %v1211
      %v1221 = vpack.c.bf16 %v1217, %v1215
      %v1222 = vpack.c.bf16 %v962, %v959
      %v1223 = vpack.c.bf16 %v970, %v967
      %v1224 = vpack.c.bf16 %v978, %v975
      %v1225 = vpack.c.bf16 %v986, %v983
      %v1227 = vsel %vm550, %v1218, 0
      %v1230 = vsel %vm550, %v1219, 0
      %v1233 = vsel %vm550, %v1220, 0
      %v1236 = vsel %vm550, %v1221, 0
      %1238 = vmatprep.subr.bf16.mxu0 0
      %1239 = vmatpush1.bf16.msra.mxu0 0
      %1240 = vmatprep.subr.bf16.mxu0 0
      %1241 = vmatpush1.bf16.msra.mxu0 0
      %1242 = vmatprep.subr.bf16.mxu0 0
      %1243 = vmatpush1.bf16.msra.mxu0 0
      %1244 = vmatprep.subr.bf16.mxu0 0
      %1245 = vmatpush1.bf16.msra.mxu0 0
      %1246 = vmatprep.subr.bf16.mxu0 0
      %1247 = vmatpush1.bf16.msra.mxu0 %v1225
      %1248 = vmatprep.subr.bf16.mxu0 0
      %1249 = vmatpush1.bf16.msra.mxu0 %v1224
      %1250 = vmatprep.subr.bf16.mxu0 0
      %1251 = vmatpush1.bf16.msra.mxu0 %v1223
      %1252 = vmatprep.subr.bf16.mxu0 0
      %1253 = vmatpush1.bf16.msra.mxu0 %v1222
      %1254 = vmatprep.subr.bf16.mxu0 0
      %1255 = vmatpush2.bf16.msra.mxu0 0
      %1256 = vmatprep.subr.bf16.mxu0 0
      %1257 = vmatpush2.bf16.msra.mxu0 0
      %1258 = vmatprep.subr.bf16.mxu0 0
      %1259 = vmatpush2.bf16.msra.mxu0 0
      %1260 = vmatprep.subr.bf16.mxu0 0
      %1261 = vmatpush2.bf16.msra.mxu0 0
      %1262 = vmatprep.subr.bf16.mxu0 0
      %1263 = vmatpush2.bf16.msra.mxu0 0
      %1264 = vmatprep.subr.bf16.mxu0 0
      %1265 = vmatpush2.bf16.msra.mxu0 0
      %1266 = vmatprep.subr.bf16.mxu0 0
      %1267 = vmatpush2.bf16.msra.mxu0 0
      %1268 = vmatprep.subr.bf16.mxu0 0
      %1269 = vmatpush2.bf16.msra.mxu0 0
      %1270 = vmatprep.mubr.bf16.mxu0 0
      %1271 = vmatmul.mubr.bf16.gmra.mxu0 %v1227
      %v1272 = vpop.f32.mrf.mxu0
      %v1273 = vadd.f32 0.0, %v1272
      %v1274 = vpop.f32.mrf.mxu0
      %v1275 = vpop.f32.mrf.mxu0
      %v1276 = vadd.f32 0.0, %v1275
      %v1277 = vpop.f32.mrf.mxu0
      %1278 = vmatprep.mubr.bf16.mxu0 0
      %1279 = vmatmul.mubr.bf16.gmra.mxu0 %v1230
      %v1280 = vpop.f32.mrf.mxu0
      %v1281 = vadd.f32 0.0, %v1280
      %v1282 = vpop.f32.mrf.mxu0
      %v1283 = vpop.f32.mrf.mxu0
      %v1284 = vadd.f32 0.0, %v1283
      %v1285 = vpop.f32.mrf.mxu0
      %1286 = vmatprep.mubr.bf16.mxu0 0
      %1287 = vmatmul.mubr.bf16.gmra.mxu0 %v1233
      %v1288 = vpop.f32.mrf.mxu0
      %v1289 = vadd.f32 0.0, %v1288
      %v1290 = vpop.f32.mrf.mxu0
      %v1291 = vpop.f32.mrf.mxu0
      %v1292 = vadd.f32 0.0, %v1291
      %v1293 = vpop.f32.mrf.mxu0
      %1294 = vmatprep.mubr.bf16.mxu0 0
      %1295 = vmatmul.mubr.bf16.gmra.mxu0 %v1236
      %v1296 = vpop.f32.mrf.mxu0
      %v1297 = vadd.f32 0.0, %v1296
      %v1298 = vpop.f32.mrf.mxu0
      %v1299 = vpop.f32.mrf.mxu0
      %v1300 = vadd.f32 0.0, %v1299
      %v1301 = vpop.f32.mrf.mxu0
      %1302 = vdwg.mxu0
      %v1303 = vmax.f32 %v1273, 0.0
      %v1304 = vmax.f32 %v1276, 0.0
      %v1305 = vmax.f32 %v1281, 0.0
      %v1306 = vmax.f32 %v1284, 0.0
      %v1307 = vmax.f32 %v1289, 0.0
      %v1308 = vmax.f32 %v1292, 0.0
      %v1309 = vmax.f32 %v1297, 0.0
      %v1310 = vmax.f32 %v1300, 0.0
      %v1311 = vpack.c.bf16 %v1304, %v1303
      %v1312 = vpack.c.bf16 %v1306, %v1305
      %v1313 = vpack.c.bf16 %v1308, %v1307
      %v1314 = vpack.c.bf16 %v1310, %v1309
      %v1315 = vld [vmem:[%s6] sm:$0xf]
      %v1316 = vld [vmem:[%s6 + $0x4] sm:$0xf]
      %v1317 = vld [vmem:[%s6 + $0x8] sm:$0xf]
      %v1318 = vld [vmem:[%s6 + $0xc] sm:$0xf]
      %v1319 = vld [vmem:[%s6 + $0x10] sm:$0xf]
      %v1320 = vld [vmem:[%s6 + $0x14] sm:$0xf]
      %v1321 = vld [vmem:[%s6 + $0x18] sm:$0xf]
      %v1322 = vld [vmem:[%s6 + $0x1c] sm:$0xf]
      %v1323 = vld [vmem:[%s7] sm:$0x1]
      %v1325 = vlaneseq
      %v1326 = vshrl.u32 %v1325, 7
      %v1327 = vsub.s32 0, %v1326
      %v1328 = vrot.slane %v1323, %v1327
      %v1338 = vunpack.c.l.b16 %v1315
      %v1339 = vunpack.c.l.b16 %v1316
      %v1340 = vunpack.c.l.b16 %v1317
      %v1341 = vunpack.c.l.b16 %v1318
      %v1342 = vunpack.c.l.b16 %v1319
      %v1343 = vunpack.c.l.b16 %v1320
      %v1344 = vunpack.c.l.b16 %v1321
      %v1345 = vunpack.c.l.b16 %v1322
      %v1346 = vpack.c.b16 %v1339, %v1338
      %v1347 = vpack.c.b16 %v1341, %v1340
      %v1348 = vpack.c.b16 %v1343, %v1342
      %v1349 = vpack.c.b16 %v1345, %v1344
      %v1355 = vsel %vm550, %v1311, 0
      %v1358 = vsel %vm550, %v1312, 0
      %v1361 = vsel %vm550, %v1313, 0
      %v1364 = vsel %vm550, %v1314, 0
      %1366 = vmatprep.subr.bf16.mxu0 0
      %1367 = vmatpush1.bf16.msra.mxu0 0
      %1368 = vmatprep.subr.bf16.mxu0 0
      %1369 = vmatpush1.bf16.msra.mxu0 0
      %1370 = vmatprep.subr.bf16.mxu0 0
      %1371 = vmatpush1.bf16.msra.mxu0 0
      %1372 = vmatprep.subr.bf16.mxu0 0
      %1373 = vmatpush1.bf16.msra.mxu0 0
      %1374 = vmatprep.subr.bf16.mxu0 0
      %1375 = vmatpush1.bf16.msra.mxu0 %v1349
      %1376 = vmatprep.subr.bf16.mxu0 0
      %1377 = vmatpush1.bf16.msra.mxu0 %v1348
      %1378 = vmatprep.subr.bf16.mxu0 0
      %1379 = vmatpush1.bf16.msra.mxu0 %v1347
      %1380 = vmatprep.subr.bf16.mxu0 0
      %1381 = vmatpush1.bf16.msra.mxu0 %v1346
      %1382 = vmatprep.subr.bf16.mxu0 0
      %1383 = vmatpush2.bf16.msra.mxu0 0
      %1384 = vmatprep.subr.bf16.mxu0 0
      %1385 = vmatpush2.bf16.msra.mxu0 0
      %1386 = vmatprep.subr.bf16.mxu0 0
      %1387 = vmatpush2.bf16.msra.mxu0 0
      %1388 = vmatprep.subr.bf16.mxu0 0
      %1389 = vmatpush2.bf16.msra.mxu0 0
      %1390 = vmatprep.subr.bf16.mxu0 0
      %1391 = vmatpush2.bf16.msra.mxu0 0
      %1392 = vmatprep.subr.bf16.mxu0 0
      %1393 = vmatpush2.bf16.msra.mxu0 0
      %1394 = vmatprep.subr.bf16.mxu0 0
      %1395 = vmatpush2.bf16.msra.mxu0 0
      %1396 = vmatprep.subr.bf16.mxu0 0
      %1397 = vmatpush2.bf16.msra.mxu0 0
      %1398 = vmatprep.mubr.bf16.mxu0 0
      %1399 = vmatmul.mubr.bf16.gmra.mxu0 %v1355
      %v1400 = vpop.f32.mrf.mxu0
      %v1401 = vadd.f32 %v1328, %v1400
      %v1402 = vpop.f32.mrf.mxu0
      %v1403 = vpop.f32.mrf.mxu0
      %v1404 = vadd.f32 %v1328, %v1403
      %v1405 = vpop.f32.mrf.mxu0
      %1406 = vmatprep.mubr.bf16.mxu0 0
      %1407 = vmatmul.mubr.bf16.gmra.mxu0 %v1358
      %v1408 = vpop.f32.mrf.mxu0
      %v1409 = vadd.f32 %v1328, %v1408
      %v1410 = vpop.f32.mrf.mxu0
      %v1411 = vpop.f32.mrf.mxu0
      %v1412 = vadd.f32 %v1328, %v1411
      %v1413 = vpop.f32.mrf.mxu0
      %1414 = vmatprep.mubr.bf16.mxu0 0
      %1415 = vmatmul.mubr.bf16.gmra.mxu0 %v1361
      %v1416 = vpop.f32.mrf.mxu0
      %v1417 = vadd.f32 %v1328, %v1416
      %v1418 = vpop.f32.mrf.mxu0
      %v1419 = vpop.f32.mrf.mxu0
      %v1420 = vadd.f32 %v1328, %v1419
      %v1421 = vpop.f32.mrf.mxu0
      %1422 = vmatprep.mubr.bf16.mxu0 0
      %1423 = vmatmul.mubr.bf16.gmra.mxu0 %v1364
      %v1424 = vpop.f32.mrf.mxu0
      %v1425 = vadd.f32 %v1328, %v1424
      %v1426 = vpop.f32.mrf.mxu0
      %v1427 = vpop.f32.mrf.mxu0
      %v1428 = vadd.f32 %v1328, %v1427
      %v1429 = vpop.f32.mrf.mxu0
      %1430 = vdwg.mxu0
      %1431 = vmax.xlane.f32.xlu0 %v1401
      %v1432 = vpop.xlane.xlu0 %1431
      %1433 = vmax.xlane.f32.xlu0 %v1404
      %v1434 = vpop.xlane.xlu0 %1433
      %1435 = vmax.xlane.f32.xlu0 %v1409
      %v1436 = vpop.xlane.xlu0 %1435
      %1437 = vmax.xlane.f32.xlu0 %v1412
      %v1438 = vpop.xlane.xlu0 %1437
      %1439 = vmax.xlane.f32.xlu0 %v1417
      %v1440 = vpop.xlane.xlu0 %1439
      %1441 = vmax.xlane.f32.xlu0 %v1420
      %v1442 = vpop.xlane.xlu0 %1441
      %1443 = vmax.xlane.f32.xlu0 %v1425
      %v1444 = vpop.xlane.xlu0 %1443
      %1445 = vmax.xlane.f32.xlu0 %v1428
      %v1446 = vpop.xlane.xlu0 %1445
      %v1447 = vsub.f32 %v1401, %v1432
      %v1448 = vsub.f32 %v1404, %v1434
      %v1449 = vsub.f32 %v1409, %v1436
      %v1450 = vsub.f32 %v1412, %v1438
      %v1451 = vsub.f32 %v1417, %v1440
      %v1452 = vsub.f32 %v1420, %v1442
      %v1453 = vsub.f32 %v1425, %v1444
      %v1454 = vsub.f32 %v1428, %v1446
      %v1455 = vmul.f32 %v1447, 1.442695
      %v1456 = vpow.pop %v1455
      %v1457 = vmul.f32 %v1448, 1.442695
      %v1458 = vpow.pop %v1457
      %v1459 = vmul.f32 %v1449, 1.442695
      %v1460 = vpow.pop %v1459
      %v1461 = vmul.f32 %v1450, 1.442695
      %v1462 = vpow.pop %v1461
      %v1463 = vmul.f32 %v1451, 1.442695
      %v1464 = vpow.pop %v1463
      %v1465 = vmul.f32 %v1452, 1.442695
      %v1466 = vpow.pop %v1465
      %v1467 = vmul.f32 %v1453, 1.442695
      %v1468 = vpow.pop %v1467
      %v1469 = vmul.f32 %v1454, 1.442695
      %v1470 = vpow.pop %v1469
      %1471 = vadd.xlane.f32.xlu0 %v1456
      %v1472 = vpop.xlane.xlu0 %1471
      %1473 = vadd.xlane.f32.xlu0 %v1458
      %v1474 = vpop.xlane.xlu0 %1473
      %1475 = vadd.xlane.f32.xlu0 %v1460
      %v1476 = vpop.xlane.xlu0 %1475
      %1477 = vadd.xlane.f32.xlu0 %v1462
      %v1478 = vpop.xlane.xlu0 %1477
      %1479 = vadd.xlane.f32.xlu0 %v1464
      %v1480 = vpop.xlane.xlu0 %1479
      %1481 = vadd.xlane.f32.xlu0 %v1466
      %v1482 = vpop.xlane.xlu0 %1481
      %1483 = vadd.xlane.f32.xlu0 %v1468
      %v1484 = vpop.xlane.xlu0 %1483
      %1485 = vadd.xlane.f32.xlu0 %v1470
      %v1486 = vpop.xlane.xlu0 %1485
      %v1487 = vlog2.pop %v1472
      %v1488 = vmul.f32 %v1487, 0.6931472
      %v1489 = vlog2.pop %v1474
      %v1490 = vmul.f32 %v1489, 0.6931472
      %v1491 = vlog2.pop %v1476
      %v1492 = vmul.f32 %v1491, 0.6931472
      %v1493 = vlog2.pop %v1478
      %v1494 = vmul.f32 %v1493, 0.6931472
      %v1495 = vlog2.pop %v1480
      %v1496 = vmul.f32 %v1495, 0.6931472
      %v1497 = vlog2.pop %v1482
      %v1498 = vmul.f32 %v1497, 0.6931472
      %v1499 = vlog2.pop %v1484
      %v1500 = vmul.f32 %v1499, 0.6931472
      %v1501 = vlog2.pop %v1486
      %v1502 = vmul.f32 %v1501, 0.6931472
      %v1503 = vsub.f32 %v1447, %v1488
      %v1504 = vsub.f32 %v1448, %v1490
      %v1505 = vsub.f32 %v1449, %v1492
      %v1506 = vsub.f32 %v1450, %v1494
      %v1507 = vsub.f32 %v1451, %v1496
      %v1508 = vsub.f32 %v1452, %v1498
      %v1509 = vsub.f32 %v1453, %v1500
      %v1510 = vsub.f32 %v1454, %v1502
      %1511 = vst [vmem:[%s325] sm:$0xff] %v1503
      %1512 = vst [vmem:[%s325 + $0x8] sm:$0xff] %v1504
      %1513 = vst [vmem:[%s325 + $0x10] sm:$0xff] %v1505
      %1514 = vst [vmem:[%s325 + $0x18] sm:$0xff] %v1506
      %1515 = vst [vmem:[%s325 + $0x20] sm:$0xff] %v1507
      %1516 = vst [vmem:[%s325 + $0x28] sm:$0xff] %v1508
      %1517 = vst [vmem:[%s325 + $0x30] sm:$0xff] %v1509
      %1518 = vst [vmem:[%s325 + $0x38] sm:$0xff] %v1510
      %p1519 = scmp.lt.s32.totalorder %s19, 1
      %s1520 = scalar_select %p1519, %s19, 1
      %s1521 = smul.addr %s1520, 8
      %s1522 = smul.addr %s1521, 8
      %s1523 = scalar_lea.vmem %s8, %s1522
      // Predicated region
      $region53: #{forward.1} parent=51 // pred_check
        %p1524 = pneg %p215
      $region54: #{forward.1} parent=51 // pred_check_branch
        %1526 = sbr.rel (%p1524) target = $region56
      $region55: #{forward.1} parent=51 // pred_region
        _
      $region56: #{forward.1} parent=51 // pred_fallthru
        _
    $region52: #{forward.1} parent=5 // pred_fallthru
      _
    %p1527 = scmp.le.s32.totalorder 2, %s14
    // Predicated region
    $region57: #{forward.1} parent=5 // pred_check
      %p1528 = pneg %p1527
    $region58: #{forward.1} parent=5 // pred_check_branch
      %1530 = sbr.rel (%p1528) target = $region60
    $region59: #{forward.1} parent=5 // pred_region
      %s1531 = ssub.s32 %s14, 2
      // Predicated region
      $region61: #{forward.1} parent=59 // pred_check
        %p1532 = pneg %p221
      $region62: #{forward.1} parent=59 // pred_check_branch
        %1534 = sbr.rel (%p1532) target = $region64
      $region63: #{forward.1} parent=59 // pred_region
        %p1535 = scmp.lt.s32.totalorder %s20, 1
        %s1536 = scalar_select %p1535, %s20, 1
        %s1537 = smul.addr %s1536, 8
        %s1538 = smul.addr %s1537, 8
        %s1539 = scalar_lea.vmem %s8, %s1538
      $region64: #{forward.1} parent=59 // pred_fallthru
        _
    $region60: #{forward.1} parent=5 // pred_fallthru
      _
  $region6: #{forward.1} parent=0 // loop_footer
    %s18 = sadd.s32 1, %s14
  $region7: #{forward.1} parent=0 // loop_footer_branch
    %13 = sbr.rel target = $region3
  $region8: #{forward.1} parent=0 // loop_exit
    _

</llo_original>
